<compile_context>
chip_gen: v7x
topology: tpu7x:2x2x1
jax: 0.10.0
libtpu: 0.0.40
codegen_flags: <defaults>
</compile_context>

<pallas_src>
import math

import jax
import jax.numpy as jnp
from jax.experimental import pallas as pl
from jax.experimental.pallas import tpu as pltpu

LN_EPS = 1e-5  # PyTorch nn.LayerNorm default


def _layernorm(x, g, b):
    # normalize over last dim (matches nn.LayerNorm(dim)); biased variance like PyTorch
    mean = jnp.mean(x, axis=-1, keepdims=True)
    var = jnp.mean((x - mean) ** 2, axis=-1, keepdims=True)
    return (x - mean) * jax.lax.rsqrt(var + LN_EPS) * g + b


def _gelu(x):
    # exact (erf-based) GELU == PyTorch nn.GELU() default
    return 0.5 * x * (1.0 + jax.lax.erf(x * (2.0 ** -0.5)))


# ----------------------------- Pallas kernels ------------------------------

def _linear_kernel(x_ref, w_ref, b_ref, o_ref):
    # x block: (TM, K) f32 ; w: (K, N) bf16 ; b: (1, N) f32 -> o: (TM, N) f32
    x = x_ref[...].astype(jnp.bfloat16)
    o_ref[...] = (jnp.dot(x, w_ref[...], preferred_element_type=jnp.float32)
                  + b_ref[...])


def _head_kernel(x_ref, g_ref, b_ref, w_ref, hb_ref, o_ref):
    # fused final LayerNorm + block-diagonal 1x1-conv head
    y = _layernorm(x_ref[...], g_ref[...], b_ref[...]).astype(jnp.bfloat16)
    o_ref[...] = (jnp.dot(y, w_ref[...], preferred_element_type=jnp.float32)
                  + hb_ref[...])


def _mixer_stack_kernel(x_ref,
                        ln1_g, ln1_b, tw1, tb1, tw2, tb2,
                        ln2_g, ln2_b, cw1, cb1, cw2, cb2,
                        o_ref):
    # grid = (batch, depth); depth is "arbitrary" and the activation block (N, D) is
    # revisited across it, so tokens stay resident in VMEM for the whole stack.
    @pl.when(pl.program_id(1) == 0)
    def _():
        o_ref[...] = x_ref[...]

    x = o_ref[...]                                                   # (N, D) f32
    # --- token mixing: PreNormResidual(FeedForward(num_patches, Conv1d k=1)) ---
    y = _layernorm(x, ln1_g[...], ln1_b[...]).astype(jnp.bfloat16)
    h = jnp.dot(tw1[...], y, preferred_element_type=jnp.float32) + tb1[...]   # (N*ef, D)
    h = _gelu(h).astype(jnp.bfloat16)
    x = x + jnp.dot(tw2[...], h, preferred_element_type=jnp.float32) + tb2[...]
    # --- channel mixing: PreNormResidual(FeedForward(dim, Linear)) ---
    y = _layernorm(x, ln2_g[...], ln2_b[...]).astype(jnp.bfloat16)
    h = jnp.dot(y, cw1[...], preferred_element_type=jnp.float32) + cb1[...]   # (N, D*ef)
    h = _gelu(h).astype(jnp.bfloat16)
    o_ref[...] = x + jnp.dot(h, cw2[...], preferred_element_type=jnp.float32) + cb2[...]


# ------------------------------- helpers ------------------------------------

def _row_tile(m, cap=512):
    """Largest multiple-of-8 divisor of m that is <= cap (or m itself if small)."""
    if m <= cap:
        return m
    for t in range(cap, 7, -8):
        if m % t == 0:
            return t
    return m


def _bytes(shape, dtype):
    return math.prod(shape) * jnp.dtype(dtype).itemsize


def _compiler_params(sem, block_bytes, extra_bytes=0):
    # double-buffered blocks + in-kernel temporaries, ~30% headroom
    need = int((2 * sum(block_bytes) + extra_bytes) * 1.3) + (2 << 20)
    return pltpu.CompilerParams(
        dimension_semantics=sem,
        vmem_limit_bytes=int(min(max(need, 16 << 20), 100 << 20)))


def _rep2(shape):
    shape = tuple(shape)
    nd = len(shape)
    return pl.BlockSpec(shape, lambda i, j: (0,) * nd)


def _rows(tm, cols):
    # (batch, row-tile) indexed block with the size-1 batch dim squeezed away
    return pl.BlockSpec((pl.Squeezed(), tm, cols), lambda i, j: (i, j, 0))


# ------------------------------- wrappers ------------------------------------

def linear_pallas(x, w, b):
    """x: (B, M, K) f32 ; w: (K, N) ; b: (1, N) -> (B, M, N) f32, row-tiled over M."""
    B, M, K = x.shape
    N = w.shape[1]
    w = w.astype(jnp.bfloat16)
    TM = _row_tile(M)
    bb = [_bytes((TM, K), jnp.float32), _bytes((K, N), jnp.bfloat16),
          _bytes((1, N), jnp.float32), _bytes((TM, N), jnp.float32)]
    return pl.pallas_call(
        _linear_kernel,
        out_shape=jax.ShapeDtypeStruct((B, M, N), jnp.float32),
        grid=(B, M // TM),
        in_specs=[_rows(TM, K), _rep2((K, N)), _rep2((1, N))],
        out_specs=_rows(TM, N),
        compiler_params=_compiler_params(("parallel", "parallel"), bb),
    )(x, w, b)


def mixer_stack_pallas(tokens, blocks):
    """Run all `depth` mixer blocks in one pallas_call; tokens stay VMEM-resident."""
    B, N, D = tokens.shape
    depth = len(blocks)
    if depth == 0:
        return tokens

    def stack(name, dtype=None):
        a = jnp.stack([blk[name] for blk in blocks])
        return a if dtype is None else a.astype(dtype)

    ws = (stack("ln1_g"), stack("ln1_b"),
          stack("tw1", jnp.bfloat16), stack("tb1"),
          stack("tw2", jnp.bfloat16), stack("tb2"),
          stack("ln2_g"), stack("ln2_b"),
          stack("cw1", jnp.bfloat16), stack("cb1"),
          stack("cw2", jnp.bfloat16), stack("cb2"))

    act_spec = pl.BlockSpec((pl.Squeezed(), N, D), lambda b, l: (b, 0, 0))

    def wspec(a):
        r, c = a.shape[1:]
        return pl.BlockSpec((pl.Squeezed(), r, c), lambda b, l: (l, 0, 0))

    ne = ws[2].shape[1]        # num_patches * expansion_factor
    de = ws[8].shape[2]        # dim * expansion_factor
    block_bytes = ([N * D * 4]
                   + [_bytes(a.shape[1:], a.dtype) for a in ws]
                   + [N * D * 4])
    extra = (ne * D + N * de) * 6      # f32 + bf16 in-kernel intermediates

    return pl.pallas_call(
        _mixer_stack_kernel,
        out_shape=jax.ShapeDtypeStruct((B, N, D), jnp.float32),
        grid=(B, depth),
        in_specs=[act_spec] + [wspec(a) for a in ws],
        out_specs=act_spec,
        compiler_params=_compiler_params(("parallel", "arbitrary"),
                                         block_bytes, extra),
    )(tokens, *ws)


def head_pallas(tokens, lnf_g, lnf_b, head_w, head_b, patch_size):
    """Fused final LayerNorm + 1x1 Conv2d head, expressed as a lane-dense
    block-diagonal (D, p*p*c_out) matmul directly on the (B, N, D) tokens."""
    B, N, D = tokens.shape
    c_out = head_w.shape[1]
    p2 = patch_size * patch_size
    NO = p2 * c_out
    w_bd = jnp.kron(jnp.eye(p2, dtype=jnp.float32), head_w).astype(jnp.bfloat16)
    hb = jnp.tile(head_b, (1, p2))                                   # (1, p2*c_out)
    TN = _row_tile(N)
    bb = [_bytes((TN, D), jnp.float32), 2 * _bytes((1, D), jnp.float32),
          _bytes((D, NO), jnp.bfloat16), _bytes((1, NO), jnp.float32),
          _bytes((TN, NO), jnp.float32)]
    return pl.pallas_call(
        _head_kernel,
        out_shape=jax.ShapeDtypeStruct((B, N, NO), jnp.float32),
        grid=(B, N // TN),
        in_specs=[_rows(TN, D), _rep2((1, D)), _rep2((1, D)),
                  _rep2((D, NO)), _rep2((1, NO))],
        out_specs=_rows(TN, NO),
        compiler_params=_compiler_params(("parallel", "parallel"), bb),
    )(tokens, lnf_g, lnf_b, w_bd, hb)


def mixsegnet_forward(x, params, *, patch_size):
    B, C, H, W = x.shape
    p = patch_size
    h, w = H // p, W // p
    N = h * w
    c_out = params["head_w"].shape[1]

    # Rearrange 'b c (h p1) (w p2) -> b (h w) (p1 p2 c)'
    xp = jnp.transpose(x.reshape(B, C, h, p, w, p), (0, 2, 4, 3, 5, 1)
                       ).reshape(B, N, p * p * C)
    tokens = linear_pallas(xp, params["embed_w"], params["embed_b"])   # patch embed
    tokens = mixer_stack_pallas(tokens, params["blocks"])              # all mixer blocks
    out = head_pallas(tokens, params["lnf_g"], params["lnf_b"],        # final LN + head
                      params["head_w"], params["head_b"], p)           # (B, N, p*p*c_out)
    # Rearrange 'b (h w) (p1 p2 c_out) -> b c_out (h p1) (w p2)'
    out = jnp.transpose(out.reshape(B, h, w, p, p, c_out), (0, 5, 1, 3, 2, 4)
                        ).reshape(B, c_out, H, W)
    return out


mixsegnet_forward_jit = jax.jit(mixsegnet_forward, static_argnames=("patch_size",))


# --------------------------- pure-JAX reference -----------------------------

def mixsegnet_reference(x, params, *, patch_size):
    B, C, H, W = x.shape
    p = patch_size
    h, w = H // p, W // p
    N = h * w
    D = params["embed_w"].shape[1]
    c_in = D // (p * p)
    c_out = params["head_w"].shape[1]
    xp = jnp.transpose(x.reshape(B, C, h, p, w, p), (0, 2, 4, 3, 5, 1)
                       ).reshape(B, N, p * p * C)
    t = xp @ params["embed_w"] + params["embed_b"]
    for blk in params["blocks"]:
        y = _layernorm(t, blk["ln1_g"], blk["ln1_b"])
        hdn = _gelu(jnp.einsum("on,bnd->bod", blk["tw1"], y) + blk["tb1"])
        t = t + jnp.einsum("no,bod->bnd", blk["tw2"], hdn) + blk["tb2"]
        y = _layernorm(t, blk["ln2_g"], blk["ln2_b"])
        hdn = _gelu(y @ blk["cw1"] + blk["cb1"])
        t = t + hdn @ blk["cw2"] + blk["cb2"]
    t = _layernorm(t, params["lnf_g"], params["lnf_b"])
    feat = t.reshape(B, N * p * p, c_in)
    out = feat @ params["head_w"] + params["head_b"]
    return jnp.transpose(out.reshape(B, h, w, p, p, c_out), (0, 5, 1, 3, 2, 4)
                         ).reshape(B, c_out, H, W)


# ------------------------------ param init ----------------------------------

def init_params(key, *, channels, patch_size, dim, depth, num_patches,
                output_channels, expansion_factor):
    p2c = patch_size * patch_size * channels
    c_in = dim // (patch_size * patch_size)
    ne = num_patches * expansion_factor
    de = dim * expansion_factor

    def nrm(k, shape, scale=0.05):
        return scale * jax.random.normal(k, shape, jnp.float32)

    keys = iter(jax.random.split(key, 8 + depth * 12))
    params = {
        "embed_w": nrm(next(keys), (p2c, dim)),
        "embed_b": nrm(next(keys), (1, dim), 0.01),
        "lnf_g": 1.0 + nrm(next(keys), (1, dim), 0.1),
        "lnf_b": nrm(next(keys), (1, dim), 0.01),
        "head_w": nrm(next(keys), (c_in, output_channels)),
        "head_b": nrm(next(keys), (1, output_channels), 0.01),
        "blocks": [],
    }
    for _ in range(depth):
        params["blocks"].append({
            "ln1_g": 1.0 + nrm(next(keys), (1, dim), 0.1),
            "ln1_b": nrm(next(keys), (1, dim), 0.01),
            "tw1": nrm(next(keys), (ne, num_patches)),
            "tb1": nrm(next(keys), (ne, 1), 0.01),
            "tw2": nrm(next(keys), (num_patches, ne)),
            "tb2": nrm(next(keys), (num_patches, 1), 0.01),
            "ln2_g": 1.0 + nrm(next(keys), (1, dim), 0.1),
            "ln2_b": nrm(next(keys), (1, dim), 0.01),
            "cw1": nrm(next(keys), (dim, de)),
            "cb1": nrm(next(keys), (1, de), 0.01),
            "cw2": nrm(next(keys), (de, dim)),
            "cb2": nrm(next(keys), (1, dim), 0.01),
        })
    return params


if __name__ == "__main__":
    # Small config consistent with MixSegNet's constraints:
    #   image_size % patch_size == 0,  dim % patch_size**2 == 0
    # dim=128 keeps every lane axis a multiple of 128 (lane-dense stores).
    image_size, channels, patch_size = 16, 4, 4
    dim, depth, output_channels, expansion_factor = 128, 2, 8, 4
    num_patches = (image_size // patch_size) ** 2

    key = jax.random.PRNGKey(0)
    kx, kp = jax.random.split(key)
    x = jax.random.normal(kx, (2, channels, image_size, image_size), jnp.float32)
    params = init_params(kp, channels=channels, patch_size=patch_size, dim=dim,
                         depth=depth, num_patches=num_patches,
                         output_channels=output_channels,
                         expansion_factor=expansion_factor)

    # TODO(synk): the `is_using_convolution_pooling` branch lazily builds a CUDA Conv2d at
    # runtime and is disabled by default; it is not implemented here.
    out = jax.block_until_ready(
        mixsegnet_forward_jit(x, params, patch_size=patch_size))
    ref = mixsegnet_reference(x, params, patch_size=patch_size)

    assert out.shape == (2, output_channels, image_size, image_size), out.shape
    max_err = float(jnp.max(jnp.abs(out - ref)))
    # bf16 MXU operands vs f32 reference -> slightly loosened tolerance
    assert jnp.allclose(out, ref, rtol=2e-2, atol=2e-2), max_err
    print("KERNEL_OK")
</pallas_src>

<mosaic_0001>
module attributes {stable_mosaic.version = 11 : i64} {
  func.func @_linear_kernel(%arg0: i32, %arg1: i32, %arg2: memref<1x16x64xf32, #tpu.memory_space<vmem>>, %arg3: memref<64x128xbf16, #tpu.memory_space<vmem>>, %arg4: memref<1x128xf32, #tpu.memory_space<vmem>>, %arg5: memref<1x16x128xf32, #tpu.memory_space<vmem>>) attributes {dimension_semantics = [#tpu.dimension_semantics<parallel>, #tpu.dimension_semantics<parallel>], iteration_bounds = array<i64: 2, 1>, scalar_prefetch = 0 : i64, scratch_operands = 0 : i64, tpu.core_type = #tpu.core_type<tc>, window_params = [{transform_indices = @transform_0, window_bounds = array<i64: 1, 16, 64>}, {pipeline_mode = #tpu.pipeline_mode<synchronous>, transform_indices = @transform_1, window_bounds = array<i64: 64, 128>}, {pipeline_mode = #tpu.pipeline_mode<synchronous>, transform_indices = @transform_2, window_bounds = array<i64: 1, 128>}, {transform_indices = @transform_3, window_bounds = array<i64: 1, 16, 128>}]} {
    %c0 = arith.constant 0 : index
    %c0_0 = arith.constant 0 : index
    %c0_1 = arith.constant 0 : index
    %0 = vector.load %arg2[%c0, %c0_0, %c0_1] : memref<1x16x64xf32, #tpu.memory_space<vmem>>, vector<1x16x64xf32>
    %1 = vector.shape_cast %0 : vector<1x16x64xf32> to vector<16x64xf32>
    %2 = arith.truncf %1 : vector<16x64xf32> to vector<16x64xbf16>
    %c0_2 = arith.constant 0 : index
    %c0_3 = arith.constant 0 : index
    %3 = vector.load %arg3[%c0_2, %c0_3] : memref<64x128xbf16, #tpu.memory_space<vmem>>, vector<64x128xbf16>
    %cst = arith.constant dense<0.000000e+00> : vector<16x128xf32>
    %4 = tpu.matmul %2, %3, %cst {dimension_numbers = #tpu.dot_dimension_numbers<[1], [0], [0], [1], [0, 0, 1, 1], [], []>} : vector<16x64xbf16>, vector<64x128xbf16>, vector<16x128xf32> -> vector<16x128xf32>
    %c0_4 = arith.constant 0 : index
    %c0_5 = arith.constant 0 : index
    %5 = vector.load %arg4[%c0_4, %c0_5] : memref<1x128xf32, #tpu.memory_space<vmem>>, vector<1x128xf32>
    %6 = vector.broadcast %5 : vector<1x128xf32> to vector<16x128xf32>
    %7 = arith.addf %4, %6 : vector<16x128xf32>
    %c0_6 = arith.constant 0 : index
    %c0_7 = arith.constant 0 : index
    %c0_8 = arith.constant 0 : index
    %8 = vector.load %arg5[%c0_6, %c0_7, %c0_8] : memref<1x16x128xf32, #tpu.memory_space<vmem>>, vector<1x16x128xf32>
    %9 = vector.shape_cast %8 : vector<1x16x128xf32> to vector<16x128xf32>
    %10 = vector.shape_cast %7 : vector<16x128xf32> to vector<1x16x128xf32>
    tpu.vector_store %arg5[%c0_6, %c0_7, %c0_8], %10 {strides = array<i32>} : memref<1x16x128xf32, #tpu.memory_space<vmem>>, vector<1x16x128xf32>,
    return
  }
  func.func @transform_0(%arg0: i32, %arg1: i32) -> (i32, i32, i32) {
    %c0_i32 = arith.constant 0 : i32
    %c0_i32_0 = arith.constant 0 : i32
    return %arg0, %arg1, %c0_i32 : i32, i32, i32
  }
  func.func @transform_1(%arg0: i32, %arg1: i32) -> (i32, i32) {
    %c0_i32 = arith.constant 0 : i32
    %c0_i32_0 = arith.constant 0 : i32
    %c0_i32_1 = arith.constant 0 : i32
    return %c0_i32, %c0_i32_0 : i32, i32
  }
  func.func @transform_2(%arg0: i32, %arg1: i32) -> (i32, i32) {
    %c0_i32 = arith.constant 0 : i32
    %c0_i32_0 = arith.constant 0 : i32
    %c0_i32_1 = arith.constant 0 : i32
    return %c0_i32, %c0_i32_0 : i32, i32
  }
  func.func @transform_3(%arg0: i32, %arg1: i32) -> (i32, i32, i32) {
    %c0_i32 = arith.constant 0 : i32
    %c0_i32_0 = arith.constant 0 : i32
    return %arg0, %arg1, %c0_i32 : i32, i32, i32
  }
}

module attributes {stable_mosaic.version = 11 : i64} {
  func.func @_mixer_stack_kernel(%arg0: i32, %arg1: i32, %arg2: memref<1x16x128xf32, #tpu.memory_space<vmem>>, %arg3: memref<1x1x128xf32, #tpu.memory_space<vmem>>, %arg4: memref<1x1x128xf32, #tpu.memory_space<vmem>>, %arg5: memref<1x64x16xbf16, #tpu.memory_space<vmem>>, %arg6: memref<1x64x1xf32, #tpu.memory_space<vmem>>, %arg7: memref<1x16x64xbf16, #tpu.memory_space<vmem>>, %arg8: memref<1x16x1xf32, #tpu.memory_space<vmem>>, %arg9: memref<1x1x128xf32, #tpu.memory_space<vmem>>, %arg10: memref<1x1x128xf32, #tpu.memory_space<vmem>>, %arg11: memref<1x128x512xbf16, #tpu.memory_space<vmem>>, %arg12: memref<1x1x512xf32, #tpu.memory_space<vmem>>, %arg13: memref<1x512x128xbf16, #tpu.memory_space<vmem>>, %arg14: memref<1x1x128xf32, #tpu.memory_space<vmem>>, %arg15: memref<1x16x128xf32, #tpu.memory_space<vmem>>) attributes {dimension_semantics = [#tpu.dimension_semantics<parallel>, #tpu.dimension_semantics<arbitrary>], iteration_bounds = array<i64: 2, 2>, scalar_prefetch = 0 : i64, scratch_operands = 0 : i64, tpu.core_type = #tpu.core_type<tc>, window_params = [{transform_indices = @transform_0, window_bounds = array<i64: 1, 16, 128>}, {transform_indices = @transform_1, window_bounds = array<i64: 1, 1, 128>}, {transform_indices = @transform_2, window_bounds = array<i64: 1, 1, 128>}, {transform_indices = @transform_3, window_bounds = array<i64: 1, 64, 16>}, {transform_indices = @transform_4, window_bounds = array<i64: 1, 64, 1>}, {transform_indices = @transform_5, window_bounds = array<i64: 1, 16, 64>}, {transform_indices = @transform_6, window_bounds = array<i64: 1, 16, 1>}, {transform_indices = @transform_7, window_bounds = array<i64: 1, 1, 128>}, {transform_indices = @transform_8, window_bounds = array<i64: 1, 1, 128>}, {transform_indices = @transform_9, window_bounds = array<i64: 1, 128, 512>}, {transform_indices = @transform_10, window_bounds = array<i64: 1, 1, 512>}, {transform_indices = @transform_11, window_bounds = array<i64: 1, 512, 128>}, {transform_indices = @transform_12, window_bounds = array<i64: 1, 1, 128>}, {transform_indices = @transform_13, window_bounds = array<i64: 1, 16, 128>}]} {
    %c0_i32 = arith.constant 0 : i32
    %0 = arith.cmpi eq, %arg1, %c0_i32 : i32
    %1 = arith.extui %0 : i1 to i32
    %c0_i32_0 = arith.constant 0 : i32
    %2 = arith.cmpi ne, %1, %c0_i32_0 : i32
    scf.if %2 {
      %c0_61 = arith.constant 0 : index
      %c0_62 = arith.constant 0 : index
      %c0_63 = arith.constant 0 : index
      %110 = vector.load %arg2[%c0_61, %c0_62, %c0_63] : memref<1x16x128xf32, #tpu.memory_space<vmem>>, vector<1x16x128xf32>
      %111 = vector.shape_cast %110 : vector<1x16x128xf32> to vector<16x128xf32>
      %c0_64 = arith.constant 0 : index
      %c0_65 = arith.constant 0 : index
      %c0_66 = arith.constant 0 : index
      %112 = vector.load %arg15[%c0_64, %c0_65, %c0_66] : memref<1x16x128xf32, #tpu.memory_space<vmem>>, vector<1x16x128xf32>
      %113 = vector.shape_cast %112 : vector<1x16x128xf32> to vector<16x128xf32>
      %114 = vector.shape_cast %111 : vector<16x128xf32> to vector<1x16x128xf32>
      tpu.vector_store %arg15[%c0_64, %c0_65, %c0_66], %114 {strides = array<i32>} : memref<1x16x128xf32, #tpu.memory_space<vmem>>, vector<1x16x128xf32>,
    } else {
    }
    %c0 = arith.constant 0 : index
    %c0_1 = arith.constant 0 : index
    %c0_2 = arith.constant 0 : index
    %3 = vector.load %arg15[%c0, %c0_1, %c0_2] : memref<1x16x128xf32, #tpu.memory_space<vmem>>, vector<1x16x128xf32>
    %4 = vector.shape_cast %3 : vector<1x16x128xf32> to vector<16x128xf32>
    %c0_3 = arith.constant 0 : index
    %c0_4 = arith.constant 0 : index
    %c0_5 = arith.constant 0 : index
    %5 = vector.load %arg3[%c0_3, %c0_4, %c0_5] : memref<1x1x128xf32, #tpu.memory_space<vmem>>, vector<1x1x128xf32>
    %6 = vector.shape_cast %5 : vector<1x1x128xf32> to vector<1x128xf32>
    %c0_6 = arith.constant 0 : index
    %c0_7 = arith.constant 0 : index
    %c0_8 = arith.constant 0 : index
    %7 = vector.load %arg4[%c0_6, %c0_7, %c0_8] : memref<1x1x128xf32, #tpu.memory_space<vmem>>, vector<1x1x128xf32>
    %8 = vector.shape_cast %7 : vector<1x1x128xf32> to vector<1x128xf32>
    %cst = arith.constant dense<0.000000e+00> : vector<16xf32>
    %9 = vector.multi_reduction <add>, %4, %cst [1] : vector<16x128xf32> to vector<16xf32>
    %10 = vector.shape_cast %9 : vector<16xf32> to vector<16x1xf32>
    %cst_9 = arith.constant 1.280000e+02 : f32
    %11 = vector.broadcast %cst_9 : f32 to vector<16x1xf32>
    %12 = arith.divf %10, %11 : vector<16x1xf32>
    %13 = vector.broadcast %12 : vector<16x1xf32> to vector<16x128xf32>
    %14 = arith.subf %4, %13 : vector<16x128xf32>
    %15 = arith.mulf %14, %14 : vector<16x128xf32>
    %cst_10 = arith.constant dense<0.000000e+00> : vector<16xf32>
    %16 = vector.multi_reduction <add>, %15, %cst_10 [1] : vector<16x128xf32> to vector<16xf32>
    %17 = vector.shape_cast %16 : vector<16xf32> to vector<16x1xf32>
    %cst_11 = arith.constant 1.280000e+02 : f32
    %18 = vector.broadcast %cst_11 : f32 to vector<16x1xf32>
    %19 = arith.divf %17, %18 : vector<16x1xf32>
    %20 = vector.broadcast %12 : vector<16x1xf32> to vector<16x128xf32>
    %21 = arith.subf %4, %20 : vector<16x128xf32>
    %cst_12 = arith.constant 9.99999974E-6 : f32
    %22 = vector.broadcast %cst_12 : f32 to vector<16x1xf32>
    %23 = arith.addf %19, %22 : vector<16x1xf32>
    %24 = math.rsqrt %23 : vector<16x1xf32>
    %25 = vector.broadcast %24 : vector<16x1xf32> to vector<16x128xf32>
    %26 = arith.mulf %21, %25 : vector<16x128xf32>
    %27 = vector.broadcast %6 : vector<1x128xf32> to vector<16x128xf32>
    %28 = arith.mulf %26, %27 : vector<16x128xf32>
    %29 = vector.broadcast %8 : vector<1x128xf32> to vector<16x128xf32>
    %30 = arith.addf %28, %29 : vector<16x128xf32>
    %31 = arith.truncf %30 : vector<16x128xf32> to vector<16x128xbf16>
    %c0_13 = arith.constant 0 : index
    %c0_14 = arith.constant 0 : index
    %c0_15 = arith.constant 0 : index
    %32 = vector.load %arg5[%c0_13, %c0_14, %c0_15] : memref<1x64x16xbf16, #tpu.memory_space<vmem>>, vector<1x64x16xbf16>
    %33 = vector.shape_cast %32 : vector<1x64x16xbf16> to vector<64x16xbf16>
    %cst_16 = arith.constant dense<0.000000e+00> : vector<64x128xf32>
    %34 = tpu.matmul %33, %31, %cst_16 {dimension_numbers = #tpu.dot_dimension_numbers<[1], [0], [0], [1], [0, 0, 1, 1], [], []>} : vector<64x16xbf16>, vector<16x128xbf16>, vector<64x128xf32> -> vector<64x128xf32>
    %c0_17 = arith.constant 0 : index
    %c0_18 = arith.constant 0 : index
    %c0_19 = arith.constant 0 : index
    %35 = vector.load %arg6[%c0_17, %c0_18, %c0_19] : memref<1x64x1xf32, #tpu.memory_space<vmem>>, vector<1x64x1xf32>
    %36 = vector.shape_cast %35 : vector<1x64x1xf32> to vector<64x1xf32>
    %37 = vector.broadcast %36 : vector<64x1xf32> to vector<64x128xf32>
    %38 = arith.addf %34, %37 : vector<64x128xf32>
    %cst_20 = arith.constant 5.000000e-01 : f32
    %39 = vector.broadcast %cst_20 : f32 to vector<64x128xf32>
    %40 = arith.mulf %39, %38 : vector<64x128xf32>
    %cst_21 = arith.constant 0.707106769 : f32
    %41 = vector.broadcast %cst_21 : f32 to vector<64x128xf32>
    %42 = arith.mulf %38, %41 : vector<64x128xf32>
    %43 = math.erf %42 : vector<64x128xf32>
    %cst_22 = arith.constant 1.000000e+00 : f32
    %44 = vector.broadcast %cst_22 : f32 to vector<64x128xf32>
    %45 = arith.addf %44, %43 : vector<64x128xf32>
    %46 = arith.mulf %40, %45 : vector<64x128xf32>
    %47 = arith.truncf %46 : vector<64x128xf32> to vector<64x128xbf16>
    %c0_23 = arith.constant 0 : index
    %c0_24 = arith.constant 0 : index
    %c0_25 = arith.constant 0 : index
    %48 = vector.load %arg7[%c0_23, %c0_24, %c0_25] : memref<1x16x64xbf16, #tpu.memory_space<vmem>>, vector<1x16x64xbf16>
    %49 = vector.shape_cast %48 : vector<1x16x64xbf16> to vector<16x64xbf16>
    %cst_26 = arith.constant dense<0.000000e+00> : vector<16x128xf32>
    %50 = tpu.matmul %49, %47, %cst_26 {dimension_numbers = #tpu.dot_dimension_numbers<[1], [0], [0], [1], [0, 0, 1, 1], [], []>} : vector<16x64xbf16>, vector<64x128xbf16>, vector<16x128xf32> -> vector<16x128xf32>
    %51 = arith.addf %4, %50 : vector<16x128xf32>
    %c0_27 = arith.constant 0 : index
    %c0_28 = arith.constant 0 : index
    %c0_29 = arith.constant 0 : index
    %52 = vector.load %arg8[%c0_27, %c0_28, %c0_29] : memref<1x16x1xf32, #tpu.memory_space<vmem>>, vector<1x16x1xf32>
    %53 = vector.shape_cast %52 : vector<1x16x1xf32> to vector<16x1xf32>
    %54 = vector.broadcast %53 : vector<16x1xf32> to vector<16x128xf32>
    %55 = arith.addf %51, %54 : vector<16x128xf32>
    %c0_30 = arith.constant 0 : index
    %c0_31 = arith.constant 0 : index
    %c0_32 = arith.constant 0 : index
    %56 = vector.load %arg9[%c0_30, %c0_31, %c0_32] : memref<1x1x128xf32, #tpu.memory_space<vmem>>, vector<1x1x128xf32>
    %57 = vector.shape_cast %56 : vector<1x1x128xf32> to vector<1x128xf32>
    %c0_33 = arith.constant 0 : index
    %c0_34 = arith.constant 0 : index
    %c0_35 = arith.constant 0 : index
    %58 = vector.load %arg10[%c0_33, %c0_34, %c0_35] : memref<1x1x128xf32, #tpu.memory_space<vmem>>, vector<1x1x128xf32>
    %59 = vector.shape_cast %58 : vector<1x1x128xf32> to vector<1x128xf32>
    %cst_36 = arith.constant dense<0.000000e+00> : vector<16xf32>
    %60 = vector.multi_reduction <add>, %55, %cst_36 [1] : vector<16x128xf32> to vector<16xf32>
    %61 = vector.shape_cast %60 : vector<16xf32> to vector<16x1xf32>
    %cst_37 = arith.constant 1.280000e+02 : f32
    %62 = vector.broadcast %cst_37 : f32 to vector<16x1xf32>
    %63 = arith.divf %61, %62 : vector<16x1xf32>
    %64 = vector.broadcast %63 : vector<16x1xf32> to vector<16x128xf32>
    %65 = arith.subf %55, %64 : vector<16x128xf32>
    %66 = arith.mulf %65, %65 : vector<16x128xf32>
    %cst_38 = arith.constant dense<0.000000e+00> : vector<16xf32>
    %67 = vector.multi_reduction <add>, %66, %cst_38 [1] : vector<16x128xf32> to vector<16xf32>
    %68 = vector.shape_cast %67 : vector<16xf32> to vector<16x1xf32>
    %cst_39 = arith.constant 1.280000e+02 : f32
    %69 = vector.broadcast %cst_39 : f32 to vector<16x1xf32>
    %70 = arith.divf %68, %69 : vector<16x1xf32>
    %71 = vector.broadcast %63 : vector<16x1xf32> to vector<16x128xf32>
    %72 = arith.subf %55, %71 : vector<16x128xf32>
    %cst_40 = arith.constant 9.99999974E-6 : f32
    %73 = vector.broadcast %cst_40 : f32 to vector<16x1xf32>
    %74 = arith.addf %70, %73 : vector<16x1xf32>
    %75 = math.rsqrt %74 : vector<16x1xf32>
    %76 = vector.broadcast %75 : vector<16x1xf32> to vector<16x128xf32>
    %77 = arith.mulf %72, %76 : vector<16x128xf32>
    %78 = vector.broadcast %57 : vector<1x128xf32> to vector<16x128xf32>
    %79 = arith.mulf %77, %78 : vector<16x128xf32>
    %80 = vector.broadcast %59 : vector<1x128xf32> to vector<16x128xf32>
    %81 = arith.addf %79, %80 : vector<16x128xf32>
    %82 = arith.truncf %81 : vector<16x128xf32> to vector<16x128xbf16>
    %c0_41 = arith.constant 0 : index
    %c0_42 = arith.constant 0 : index
    %c0_43 = arith.constant 0 : index
    %83 = vector.load %arg11[%c0_41, %c0_42, %c0_43] : memref<1x128x512xbf16, #tpu.memory_space<vmem>>, vector<1x128x512xbf16>
    %84 = vector.shape_cast %83 : vector<1x128x512xbf16> to vector<128x512xbf16>
    %cst_44 = arith.constant dense<0.000000e+00> : vector<16x512xf32>
    %85 = tpu.matmul %82, %84, %cst_44 {dimension_numbers = #tpu.dot_dimension_numbers<[1], [0], [0], [1], [0, 0, 1, 1], [], []>} : vector<16x128xbf16>, vector<128x512xbf16>, vector<16x512xf32> -> vector<16x512xf32>
    %c0_45 = arith.constant 0 : index
    %c0_46 = arith.constant 0 : index
    %c0_47 = arith.constant 0 : index
    %86 = vector.load %arg12[%c0_45, %c0_46, %c0_47] : memref<1x1x512xf32, #tpu.memory_space<vmem>>, vector<1x1x512xf32>
    %87 = vector.shape_cast %86 : vector<1x1x512xf32> to vector<1x512xf32>
    %88 = vector.broadcast %87 : vector<1x512xf32> to vector<16x512xf32>
    %89 = arith.addf %85, %88 : vector<16x512xf32>
    %cst_48 = arith.constant 5.000000e-01 : f32
    %90 = vector.broadcast %cst_48 : f32 to vector<16x512xf32>
    %91 = arith.mulf %90, %89 : vector<16x512xf32>
    %cst_49 = arith.constant 0.707106769 : f32
    %92 = vector.broadcast %cst_49 : f32 to vector<16x512xf32>
    %93 = arith.mulf %89, %92 : vector<16x512xf32>
    %94 = math.erf %93 : vector<16x512xf32>
    %cst_50 = arith.constant 1.000000e+00 : f32
    %95 = vector.broadcast %cst_50 : f32 to vector<16x512xf32>
    %96 = arith.addf %95, %94 : vector<16x512xf32>
    %97 = arith.mulf %91, %96 : vector<16x512xf32>
    %98 = arith.truncf %97 : vector<16x512xf32> to vector<16x512xbf16>
    %c0_51 = arith.constant 0 : index
    %c0_52 = arith.constant 0 : index
    %c0_53 = arith.constant 0 : index
    %99 = vector.load %arg13[%c0_51, %c0_52, %c0_53] : memref<1x512x128xbf16, #tpu.memory_space<vmem>>, vector<1x512x128xbf16>
    %100 = vector.shape_cast %99 : vector<1x512x128xbf16> to vector<512x128xbf16>
    %cst_54 = arith.constant dense<0.000000e+00> : vector<16x128xf32>
    %101 = tpu.matmul %98, %100, %cst_54 {dimension_numbers = #tpu.dot_dimension_numbers<[1], [0], [0], [1], [0, 0, 1, 1], [], []>} : vector<16x512xbf16>, vector<512x128xbf16>, vector<16x128xf32> -> vector<16x128xf32>
    %102 = arith.addf %55, %101 : vector<16x128xf32>
    %c0_55 = arith.constant 0 : index
    %c0_56 = arith.constant 0 : index
    %c0_57 = arith.constant 0 : index
    %103 = vector.load %arg14[%c0_55, %c0_56, %c0_57] : memref<1x1x128xf32, #tpu.memory_space<vmem>>, vector<1x1x128xf32>
    %104 = vector.shape_cast %103 : vector<1x1x128xf32> to vector<1x128xf32>
    %105 = vector.broadcast %104 : vector<1x128xf32> to vector<16x128xf32>
    %106 = arith.addf %102, %105 : vector<16x128xf32>
    %c0_58 = arith.constant 0 : index
    %c0_59 = arith.constant 0 : index
    %c0_60 = arith.constant 0 : index
    %107 = vector.load %arg15[%c0_58, %c0_59, %c0_60] : memref<1x16x128xf32, #tpu.memory_space<vmem>>, vector<1x16x128xf32>
    %108 = vector.shape_cast %107 : vector<1x16x128xf32> to vector<16x128xf32>
    %109 = vector.shape_cast %106 : vector<16x128xf32> to vector<1x16x128xf32>
    tpu.vector_store %arg15[%c0_58, %c0_59, %c0_60], %109 {strides = array<i32>} : memref<1x16x128xf32, #tpu.memory_space<vmem>>, vector<1x16x128xf32>,
    return
  }
  func.func @transform_0(%arg0: i32, %arg1: i32) -> (i32, i32, i32) {
    %c0_i32 = arith.constant 0 : i32
    %c0_i32_0 = arith.constant 0 : i32
    %c0_i32_1 = arith.constant 0 : i32
    return %arg0, %c0_i32, %c0_i32_0 : i32, i32, i32
  }
  func.func @transform_1(%arg0: i32, %arg1: i32) -> (i32, i32, i32) {
    %c0_i32 = arith.constant 0 : i32
    %c0_i32_0 = arith.constant 0 : i32
    %c0_i32_1 = arith.constant 0 : i32
    return %arg1, %c0_i32, %c0_i32_0 : i32, i32, i32
  }
  func.func @transform_2(%arg0: i32, %arg1: i32) -> (i32, i32, i32) {
    %c0_i32 = arith.constant 0 : i32
    %c0_i32_0 = arith.constant 0 : i32
    %c0_i32_1 = arith.constant 0 : i32
    return %arg1, %c0_i32, %c0_i32_0 : i32, i32, i32
  }
  func.func @transform_3(%arg0: i32, %arg1: i32) -> (i32, i32, i32) {
    %c0_i32 = arith.constant 0 : i32
    %c0_i32_0 = arith.constant 0 : i32
    %c0_i32_1 = arith.constant 0 : i32
    return %arg1, %c0_i32, %c0_i32_0 : i32, i32, i32
  }
  func.func @transform_4(%arg0: i32, %arg1: i32) -> (i32, i32, i32) {
    %c0_i32 = arith.constant 0 : i32
    %c0_i32_0 = arith.constant 0 : i32
    %c0_i32_1 = arith.constant 0 : i32
    return %arg1, %c0_i32, %c0_i32_0 : i32, i32, i32
  }
  func.func @transform_5(%arg0: i32, %arg1: i32) -> (i32, i32, i32) {
    %c0_i32 = arith.constant 0 : i32
    %c0_i32_0 = arith.constant 0 : i32
    %c0_i32_1 = arith.constant 0 : i32
    return %arg1, %c0_i32, %c0_i32_0 : i32, i32, i32
  }
  func.func @transform_6(%arg0: i32, %arg1: i32) -> (i32, i32, i32) {
    %c0_i32 = arith.constant 0 : i32
    %c0_i32_0 = arith.constant 0 : i32
    %c0_i32_1 = arith.constant 0 : i32
    return %arg1, %c0_i32, %c0_i32_0 : i32, i32, i32
  }
  func.func @transform_7(%arg0: i32, %arg1: i32) -> (i32, i32, i32) {
    %c0_i32 = arith.constant 0 : i32
    %c0_i32_0 = arith.constant 0 : i32
    %c0_i32_1 = arith.constant 0 : i32
    return %arg1, %c0_i32, %c0_i32_0 : i32, i32, i32
  }
  func.func @transform_8(%arg0: i32, %arg1: i32) -> (i32, i32, i32) {
    %c0_i32 = arith.constant 0 : i32
    %c0_i32_0 = arith.constant 0 : i32
    %c0_i32_1 = arith.constant 0 : i32
    return %arg1, %c0_i32, %c0_i32_0 : i32, i32, i32
  }
  func.func @transform_9(%arg0: i32, %arg1: i32) -> (i32, i32, i32) {
    %c0_i32 = arith.constant 0 : i32
    %c0_i32_0 = arith.constant 0 : i32
    %c0_i32_1 = arith.constant 0 : i32
    return %arg1, %c0_i32, %c0_i32_0 : i32, i32, i32
  }
  func.func @transform_10(%arg0: i32, %arg1: i32) -> (i32, i32, i32) {
    %c0_i32 = arith.constant 0 : i32
    %c0_i32_0 = arith.constant 0 : i32
    %c0_i32_1 = arith.constant 0 : i32
    return %arg1, %c0_i32, %c0_i32_0 : i32, i32, i32
  }
  func.func @transform_11(%arg0: i32, %arg1: i32) -> (i32, i32, i32) {
    %c0_i32 = arith.constant 0 : i32
    %c0_i32_0 = arith.constant 0 : i32
    %c0_i32_1 = arith.constant 0 : i32
    return %arg1, %c0_i32, %c0_i32_0 : i32, i32, i32
  }
  func.func @transform_12(%arg0: i32, %arg1: i32) -> (i32, i32, i32) {
    %c0_i32 = arith.constant 0 : i32
    %c0_i32_0 = arith.constant 0 : i32
    %c0_i32_1 = arith.constant 0 : i32
    return %arg1, %c0_i32, %c0_i32_0 : i32, i32, i32
  }
  func.func @transform_13(%arg0: i32, %arg1: i32) -> (i32, i32, i32) {
    %c0_i32 = arith.constant 0 : i32
    %c0_i32_0 = arith.constant 0 : i32
    %c0_i32_1 = arith.constant 0 : i32
    return %arg0, %c0_i32, %c0_i32_0 : i32, i32, i32
  }
}

module attributes {stable_mosaic.version = 11 : i64} {
  func.func @_head_kernel(%arg0: i32, %arg1: i32, %arg2: memref<1x16x128xf32, #tpu.memory_space<vmem>>, %arg3: memref<1x128xf32, #tpu.memory_space<vmem>>, %arg4: memref<1x128xf32, #tpu.memory_space<vmem>>, %arg5: memref<128x128xbf16, #tpu.memory_space<vmem>>, %arg6: memref<1x128xf32, #tpu.memory_space<vmem>>, %arg7: memref<1x16x128xf32, #tpu.memory_space<vmem>>) attributes {dimension_semantics = [#tpu.dimension_semantics<parallel>, #tpu.dimension_semantics<parallel>], iteration_bounds = array<i64: 2, 1>, scalar_prefetch = 0 : i64, scratch_operands = 0 : i64, tpu.core_type = #tpu.core_type<tc>, window_params = [{transform_indices = @transform_0, window_bounds = array<i64: 1, 16, 128>}, {pipeline_mode = #tpu.pipeline_mode<synchronous>, transform_indices = @transform_1, window_bounds = array<i64: 1, 128>}, {pipeline_mode = #tpu.pipeline_mode<synchronous>, transform_indices = @transform_2, window_bounds = array<i64: 1, 128>}, {pipeline_mode = #tpu.pipeline_mode<synchronous>, transform_indices = @transform_3, window_bounds = array<i64: 128, 128>}, {pipeline_mode = #tpu.pipeline_mode<synchronous>, transform_indices = @transform_4, window_bounds = array<i64: 1, 128>}, {transform_indices = @transform_5, window_bounds = array<i64: 1, 16, 128>}]} {
    %c0 = arith.constant 0 : index
    %c0_0 = arith.constant 0 : index
    %c0_1 = arith.constant 0 : index
    %0 = vector.load %arg2[%c0, %c0_0, %c0_1] : memref<1x16x128xf32, #tpu.memory_space<vmem>>, vector<1x16x128xf32>
    %1 = vector.shape_cast %0 : vector<1x16x128xf32> to vector<16x128xf32>
    %c0_2 = arith.constant 0 : index
    %c0_3 = arith.constant 0 : index
    %2 = vector.load %arg3[%c0_2, %c0_3] : memref<1x128xf32, #tpu.memory_space<vmem>>, vector<1x128xf32>
    %c0_4 = arith.constant 0 : index
    %c0_5 = arith.constant 0 : index
    %3 = vector.load %arg4[%c0_4, %c0_5] : memref<1x128xf32, #tpu.memory_space<vmem>>, vector<1x128xf32>
    %cst = arith.constant dense<0.000000e+00> : vector<16xf32>
    %4 = vector.multi_reduction <add>, %1, %cst [1] : vector<16x128xf32> to vector<16xf32>
    %5 = vector.shape_cast %4 : vector<16xf32> to vector<16x1xf32>
    %cst_6 = arith.constant 1.280000e+02 : f32
    %6 = vector.broadcast %cst_6 : f32 to vector<16x1xf32>
    %7 = arith.divf %5, %6 : vector<16x1xf32>
    %8 = vector.broadcast %7 : vector<16x1xf32> to vector<16x128xf32>
    %9 = arith.subf %1, %8 : vector<16x128xf32>
    %10 = arith.mulf %9, %9 : vector<16x128xf32>
    %cst_7 = arith.constant dense<0.000000e+00> : vector<16xf32>
    %11 = vector.multi_reduction <add>, %10, %cst_7 [1] : vector<16x128xf32> to vector<16xf32>
    %12 = vector.shape_cast %11 : vector<16xf32> to vector<16x1xf32>
    %cst_8 = arith.constant 1.280000e+02 : f32
    %13 = vector.broadcast %cst_8 : f32 to vector<16x1xf32>
    %14 = arith.divf %12, %13 : vector<16x1xf32>
    %15 = vector.broadcast %7 : vector<16x1xf32> to vector<16x128xf32>
    %16 = arith.subf %1, %15 : vector<16x128xf32>
    %cst_9 = arith.constant 9.99999974E-6 : f32
    %17 = vector.broadcast %cst_9 : f32 to vector<16x1xf32>
    %18 = arith.addf %14, %17 : vector<16x1xf32>
    %19 = math.rsqrt %18 : vector<16x1xf32>
    %20 = vector.broadcast %19 : vector<16x1xf32> to vector<16x128xf32>
    %21 = arith.mulf %16, %20 : vector<16x128xf32>
    %22 = vector.broadcast %2 : vector<1x128xf32> to vector<16x128xf32>
    %23 = arith.mulf %21, %22 : vector<16x128xf32>
    %24 = vector.broadcast %3 : vector<1x128xf32> to vector<16x128xf32>
    %25 = arith.addf %23, %24 : vector<16x128xf32>
    %26 = arith.truncf %25 : vector<16x128xf32> to vector<16x128xbf16>
    %c0_10 = arith.constant 0 : index
    %c0_11 = arith.constant 0 : index
    %27 = vector.load %arg5[%c0_10, %c0_11] : memref<128x128xbf16, #tpu.memory_space<vmem>>, vector<128x128xbf16>
    %cst_12 = arith.constant dense<0.000000e+00> : vector<16x128xf32>
    %28 = tpu.matmul %26, %27, %cst_12 {dimension_numbers = #tpu.dot_dimension_numbers<[1], [0], [0], [1], [0, 0, 1, 1], [], []>} : vector<16x128xbf16>, vector<128x128xbf16>, vector<16x128xf32> -> vector<16x128xf32>
    %c0_13 = arith.constant 0 : index
    %c0_14 = arith.constant 0 : index
    %29 = vector.load %arg6[%c0_13, %c0_14] : memref<1x128xf32, #tpu.memory_space<vmem>>, vector<1x128xf32>
    %30 = vector.broadcast %29 : vector<1x128xf32> to vector<16x128xf32>
    %31 = arith.addf %28, %30 : vector<16x128xf32>
    %c0_15 = arith.constant 0 : index
    %c0_16 = arith.constant 0 : index
    %c0_17 = arith.constant 0 : index
    %32 = vector.load %arg7[%c0_15, %c0_16, %c0_17] : memref<1x16x128xf32, #tpu.memory_space<vmem>>, vector<1x16x128xf32>
    %33 = vector.shape_cast %32 : vector<1x16x128xf32> to vector<16x128xf32>
    %34 = vector.shape_cast %31 : vector<16x128xf32> to vector<1x16x128xf32>
    tpu.vector_store %arg7[%c0_15, %c0_16, %c0_17], %34 {strides = array<i32>} : memref<1x16x128xf32, #tpu.memory_space<vmem>>, vector<1x16x128xf32>,
    return
  }
  func.func @transform_0(%arg0: i32, %arg1: i32) -> (i32, i32, i32) {
    %c0_i32 = arith.constant 0 : i32
    %c0_i32_0 = arith.constant 0 : i32
    return %arg0, %arg1, %c0_i32 : i32, i32, i32
  }
  func.func @transform_1(%arg0: i32, %arg1: i32) -> (i32, i32) {
    %c0_i32 = arith.constant 0 : i32
    %c0_i32_0 = arith.constant 0 : i32
    %c0_i32_1 = arith.constant 0 : i32
    return %c0_i32, %c0_i32_0 : i32, i32
  }
  func.func @transform_2(%arg0: i32, %arg1: i32) -> (i32, i32) {
    %c0_i32 = arith.constant 0 : i32
    %c0_i32_0 = arith.constant 0 : i32
    %c0_i32_1 = arith.constant 0 : i32
    return %c0_i32, %c0_i32_0 : i32, i32
  }
  func.func @transform_3(%arg0: i32, %arg1: i32) -> (i32, i32) {
    %c0_i32 = arith.constant 0 : i32
    %c0_i32_0 = arith.constant 0 : i32
    %c0_i32_1 = arith.constant 0 : i32
    return %c0_i32, %c0_i32_0 : i32, i32
  }
  func.func @transform_4(%arg0: i32, %arg1: i32) -> (i32, i32) {
    %c0_i32 = arith.constant 0 : i32
    %c0_i32_0 = arith.constant 0 : i32
    %c0_i32_1 = arith.constant 0 : i32
    return %c0_i32, %c0_i32_0 : i32, i32
  }
  func.func @transform_5(%arg0: i32, %arg1: i32) -> (i32, i32, i32) {
    %c0_i32 = arith.constant 0 : i32
    %c0_i32_0 = arith.constant 0 : i32
    return %arg0, %arg1, %c0_i32 : i32, i32, i32
  }
}

</mosaic_0001>

<llo_original>
// kernel: mixsegnet_forward.3
$region0: #{mixsegnet_forward.3}
  #allocation0 [shape = 'u32[]', space=smem, size = 0x4, offset = 0x4, fixed_abs, tag = 'smem constant byte address 0x4 - core index']
  #allocation1 [shape = 'u32[144,128]{1,0:T(1,128)}', space=vmem, size = 0x12000, scoped, tag = 'internal scratch']
  %s0 = inlined_call_operand.vmem [shape: f32[2,16,64], index: 0, kind: input, shape index: {}]
  %s1 = inlined_call_operand.vmem [shape: bf16[64,128], index: 1, kind: input, shape index: {}]
  %s2 = inlined_call_operand.vmem [shape: f32[1,128], index: 2, kind: input, shape index: {}]
  %s3 = inlined_call_operand.vmem [shape: f32[2,16,128], index: 3, kind: output, shape index: {}]
  %s4 = sld [smem:[#allocation0]]
  $region45: #{mixsegnet_forward.3} parent=0
    _
  %s6 = ssub.s32 1, %s4
  %s7 = scalar_select 0, %s6, %s4
  loop: start=0, step=1, limit=4
  $region2: #{mixsegnet_forward.3} parent=0 // loop_pre_header
    _
  $region3: #{mixsegnet_forward.3} parent=0 // loop_header
    %s9 = sphi 0, %s13
    %p10 = scmp.ge.s32.totalorder %s9, 4
    %s16 = sphi 0, %s28
    %s17 = sphi 0, %s24
    %s18 = sphi 0, %s16
    %s19 = sphi 0, %s17
    %s20 = sphi 0, %s18
    %s21 = sphi 0, %s19
    %s33 = sphi 0, %s35
    %s36 = sphi 0, %s33
    %s37 = sphi 0, %s36
    %s53 = sphi 0, %s37
    %s57 = sphi 0, %s57
    %s59 = sphi 0, %s57
    %s60 = sphi 0, %s59
    %s74 = sphi 0, %s60
    %s78 = sphi 0, %s78
    %s80 = sphi 0, %s78
    %s81 = sphi 0, %s80
    %s95 = sphi 0, %s81
    %s103 = sphi 0, %s105
    %s106 = sphi 0, %s103
    %s107 = sphi 0, %s106
    %s123 = sphi 0, %s107
  $region4: #{mixsegnet_forward.3} parent=0 // loop_header_branch
    %12 = sbr.rel (%p10) target = $region8
  $region5: #{mixsegnet_forward.3} parent=0 // loop_body
    %s14 = ssub.s32 %s9, 1
    %s15 = ssub.s32 %s9, 2
    %s22 = sadd.s32 1, %s17
    %p23 = scmp.ge.s32.totalorder %s22, 1
    %s24 = scalar_select %p23, 0, %s22
    %s25 = sadd.s32 1, %s16
    %s26 = scalar_select %p23, %s25, %s16
    %p27 = scmp.ge.s32.totalorder %s26, 2
    %s28 = scalar_select %p27, 0, %s26
    %s29 = ssub.s32 %s16, %s28
    %s30 = ssub.s32 %s17, %s24
    %s31 = sor.u32 %s29, %s30
    %p32 = scmp.eq.s32.totalorder %s31, 0
    %s34 = sadd.s32 %s33, 1
    %s35 = scalar_select %p32, %s33, %s34
    %p38 = pneg %p32
    %p39 = scmp.eq.s32.totalorder %s9, 1
    %p40 = por %p38, %p39
    %p41 = scmp.ne.s32.totalorder %s33, %s36
    %p42 = scmp.eq.s32.totalorder %s9, 0
    %p43 = por %p41, %p42
    %p44 = scmp.ne.s32.totalorder %s33, %s36
    %p45 = scmp.eq.s32.totalorder %s14, 1
    %p46 = por %p44, %p45
    %p47 = scmp.ne.s32.totalorder %s36, %s37
    %p48 = scmp.eq.s32.totalorder %s14, 0
    %p49 = por %p47, %p48
    %p50 = scmp.ne.s32.totalorder %s36, %s37
    %p51 = scmp.eq.s32.totalorder %s15, 1
    %p52 = por %p50, %p51
    %p54 = scmp.ne.s32.totalorder %s37, %s53
    %p55 = scmp.eq.s32.totalorder %s15, 0
    %p56 = por %p54, %p55
    %s58 = sadd.s32 %s57, 1
    %p61 = scmp.eq.s32.totalorder %s9, 1
    %p62 = scmp.ne.s32.totalorder %s57, %s59
    %p63 = scmp.eq.s32.totalorder %s9, 0
    %p64 = por %p62, %p63
    %p65 = scmp.ne.s32.totalorder %s57, %s59
    %p66 = scmp.eq.s32.totalorder %s14, 1
    %p67 = por %p65, %p66
    %p68 = scmp.ne.s32.totalorder %s59, %s60
    %p69 = scmp.eq.s32.totalorder %s14, 0
    %p70 = por %p68, %p69
    %p71 = scmp.ne.s32.totalorder %s59, %s60
    %p72 = scmp.eq.s32.totalorder %s15, 1
    %p73 = por %p71, %p72
    %p75 = scmp.ne.s32.totalorder %s60, %s74
    %p76 = scmp.eq.s32.totalorder %s15, 0
    %p77 = por %p75, %p76
    %s79 = sadd.s32 %s78, 1
    %p82 = scmp.eq.s32.totalorder %s9, 1
    %p83 = scmp.ne.s32.totalorder %s78, %s80
    %p84 = scmp.eq.s32.totalorder %s9, 0
    %p85 = por %p83, %p84
    %p86 = scmp.ne.s32.totalorder %s78, %s80
    %p87 = scmp.eq.s32.totalorder %s14, 1
    %p88 = por %p86, %p87
    %p89 = scmp.ne.s32.totalorder %s80, %s81
    %p90 = scmp.eq.s32.totalorder %s14, 0
    %p91 = por %p89, %p90
    %p92 = scmp.ne.s32.totalorder %s80, %s81
    %p93 = scmp.eq.s32.totalorder %s15, 1
    %p94 = por %p92, %p93
    %p96 = scmp.ne.s32.totalorder %s81, %s95
    %p97 = scmp.eq.s32.totalorder %s15, 0
    %p98 = por %p96, %p97
    %s99 = ssub.s32 %s16, %s28
    %s100 = ssub.s32 %s17, %s24
    %s101 = sor.u32 %s99, %s100
    %p102 = scmp.eq.s32.totalorder %s101, 0
    %s104 = sadd.s32 %s103, 1
    %s105 = scalar_select %p102, %s103, %s104
    %p108 = pneg %p102
    %p109 = scmp.eq.s32.totalorder %s9, 1
    %p110 = por %p108, %p109
    %p111 = scmp.ne.s32.totalorder %s103, %s106
    %p112 = scmp.eq.s32.totalorder %s9, 0
    %p113 = por %p111, %p112
    %p114 = scmp.ne.s32.totalorder %s103, %s106
    %p115 = scmp.eq.s32.totalorder %s14, 1
    %p116 = por %p114, %p115
    %p117 = scmp.ne.s32.totalorder %s106, %s107
    %p118 = scmp.eq.s32.totalorder %s14, 0
    %p119 = por %p117, %p118
    %p120 = scmp.ne.s32.totalorder %s106, %s107
    %p121 = scmp.eq.s32.totalorder %s15, 1
    %p122 = por %p120, %p121
    %p124 = scmp.ne.s32.totalorder %s107, %s123
    %p125 = scmp.eq.s32.totalorder %s15, 0
    %p126 = por %p124, %p125
    %p127 = scmp.le.s32.totalorder 1, %s9
    %p128 = scmp.lt.s32.totalorder %s9, 3
    %p129 = pnand %p127, %p128
    %p130 = pneg %p129
    // Predicated region
    $region9: #{mixsegnet_forward.3} parent=5 // pred_check
      _
    $region10: #{mixsegnet_forward.3} parent=5 // pred_check_branch
      %132 = sbr.rel (%p129) target = $region12
    $region11: #{mixsegnet_forward.3} parent=5 // pred_region
      %s133 = ssub.s32 %s9, 1
      // Predicated region
      $region13: #{mixsegnet_forward.3} parent=11 // pred_check
        %p134 = pneg %p70
      $region14: #{mixsegnet_forward.3} parent=11 // pred_check_branch
        %136 = sbr.rel (%p134) target = $region16
      $region15: #{mixsegnet_forward.3} parent=11 // pred_region
        _
      $region16: #{mixsegnet_forward.3} parent=11 // pred_fallthru
        _
      // Predicated region
      $region17: #{mixsegnet_forward.3} parent=11 // pred_check
        %p137 = pneg %p91
      $region18: #{mixsegnet_forward.3} parent=11 // pred_check_branch
        %139 = sbr.rel (%p137) target = $region20
      $region19: #{mixsegnet_forward.3} parent=11 // pred_region
        _
      $region20: #{mixsegnet_forward.3} parent=11 // pred_fallthru
        _
    $region12: #{mixsegnet_forward.3} parent=5 // pred_fallthru
      _
    %p140 = scmp.lt.s32.totalorder %s9, 2
    // Predicated region
    $region21: #{mixsegnet_forward.3} parent=5 // pred_check
      %p141 = pneg %p140
    $region22: #{mixsegnet_forward.3} parent=5 // pred_check_branch
      %143 = sbr.rel (%p141) target = $region24
    $region23: #{mixsegnet_forward.3} parent=5 // pred_region
      // Predicated region
      $region25: #{mixsegnet_forward.3} parent=23 // pred_check
        %p144 = pneg %p43
      $region26: #{mixsegnet_forward.3} parent=23 // pred_check_branch
        %146 = sbr.rel (%p144) target = $region28
      $region27: #{mixsegnet_forward.3} parent=23 // pred_region
        %s147 = smul.u32 2, %s17
        %p148 = scmp.lt.s32.totalorder %s16, 1
        %s149 = scalar_select %p148, %s16, 1
        %p150 = scmp.lt.s32.totalorder %s147, 1
        %s151 = scalar_select %p150, %s147, 1
        %s152 = smul.addr %s149, 2
        %s153 = sadd.s32 %s151, %s152
        %s154 = smul.addr %s153, 8
        %s155 = scalar_lea.vmem %s0, %s154
        %s156 = smul.u32 2, %s17
      $region28: #{mixsegnet_forward.3} parent=23 // pred_fallthru
        _
    $region24: #{mixsegnet_forward.3} parent=5 // pred_fallthru
      _
    %p157 = scmp.le.s32.totalorder 1, %s9
    %p158 = scmp.lt.s32.totalorder %s9, 3
    %p159 = pnand %p157, %p158
    %p160 = pneg %p159
    // Predicated region
    $region29: #{mixsegnet_forward.3} parent=5 // pred_check
      _
    $region30: #{mixsegnet_forward.3} parent=5 // pred_check_branch
      %162 = sbr.rel (%p159) target = $region32
    $region31: #{mixsegnet_forward.3} parent=5 // pred_region
      %s163 = ssub.s32 %s9, 1
      %s164 = smul.u32 2, %s19
      %p165 = scmp.lt.s32.totalorder %s18, 1
      %s166 = scalar_select %p165, %s18, 1
      %p167 = scmp.lt.s32.totalorder %s164, 1
      %s168 = scalar_select %p167, %s164, 1
      %s169 = smul.addr %s166, 2
      %s170 = sadd.s32 %s168, %s169
      %s171 = smul.addr %s170, 8
      %s172 = scalar_lea.vmem %s0, %s171
      %p173 = pneg %p49
      %p174 = pneg %p46
      %p175 = pneg %p70
      %p176 = pneg %p67
      %p177 = pneg %p91
      %p178 = pneg %p88
      %p179 = pneg %p119
      %p180 = pneg %p116
      %s181 = smul.u32 2, %s19
      %p182 = scmp.lt.s32.totalorder %s18, 1
      %s183 = scalar_select %p182, %s18, 1
      %p184 = scmp.lt.s32.totalorder %s181, 1
      %s185 = scalar_select %p184, %s181, 1
      %s186 = smul.addr %s183, 2
      %s187 = sadd.s32 %s185, %s186
      %s188 = smul.addr %s187, 8
      %s189 = scalar_lea.vmem %s3, %s188
      %s190 = smul.u32 2, %s19
      %p191 = scmp.lt.s32.totalorder %s18, 1
      %s192 = scalar_select %p191, %s18, 1
      %p193 = scmp.lt.s32.totalorder %s190, 1
      %s194 = scalar_select %p193, %s190, 1
      %s195 = smul.addr %s192, 2
      %s196 = sadd.s32 %s194, %s195
      %s197 = smul.addr %s196, 8
      %s198 = scalar_lea.vmem %s0, %s197
      %s199 = smul.u32 2, %s19
      %s200 = smul.u32 2, %s19
      %p201 = scmp.lt.s32.totalorder %s18, 1
      %s202 = scalar_select %p201, %s18, 1
      %p203 = scmp.lt.s32.totalorder %s200, 1
      %s204 = scalar_select %p203, %s200, 1
      %s205 = smul.addr %s202, 2
      %s206 = sadd.s32 %s204, %s205
      %s207 = smul.addr %s206, 8
      %s208 = scalar_lea.vmem %s3, %s207
      %s209 = smul.u32 2, %s19
      %v211 = vld [vmem:[%s198] sm:$0xff]
      %v212 = vld [vmem:[%s198 + $0x8] sm:$0xff]
      %v213 = vpack.c.bf16 %v212, %v211
      %v214 = vld [vmem:[%s1] sm:$0xf]
      %v215 = vld [vmem:[%s1 + $0x4] sm:$0xf]
      %v216 = vld [vmem:[%s1 + $0x8] sm:$0xf]
      %v217 = vld [vmem:[%s1 + $0xc] sm:$0xf]
      %v218 = vld [vmem:[%s1 + $0x10] sm:$0xf]
      %v219 = vld [vmem:[%s1 + $0x14] sm:$0xf]
      %v220 = vld [vmem:[%s1 + $0x18] sm:$0xf]
      %v221 = vld [vmem:[%s1 + $0x1c] sm:$0xf]
      %v222 = vld [vmem:[%s2] sm:$0x1]
      %v224 = vlaneseq
      %v225 = vshrl.u32 %v224, 7
      %v226 = vsub.s32 0, %v225
      %v227 = vrot.slane %v222, %v226
      %v237 = vunpack.c.l.b16 %v214
      %v238 = vunpack.c.l.b16 %v215
      %v239 = vunpack.c.l.b16 %v216
      %v240 = vunpack.c.l.b16 %v217
      %v241 = vunpack.c.l.b16 %v218
      %v242 = vunpack.c.l.b16 %v219
      %v243 = vunpack.c.l.b16 %v220
      %v244 = vunpack.c.l.b16 %v221
      %v245 = vpack.c.b16 %v238, %v237
      %v246 = vpack.c.b16 %v240, %v239
      %v247 = vpack.c.b16 %v242, %v241
      %v248 = vpack.c.b16 %v244, %v243
      %vm253 = vcmask 523264
      %v255 = vsel %vm253, %v213, 0
      %257 = vmatprep.subr.bf16.mxu0 0
      %258 = vmatpush1.bf16.msra.mxu0 %v245
      %259 = vmatprep.subr.bf16.mxu0 0
      %260 = vmatpush1.bf16.msra.mxu0 %v246
      %261 = vmatprep.subr.bf16.mxu0 0
      %262 = vmatpush1.bf16.msra.mxu0 %v247
      %263 = vmatprep.subr.bf16.mxu0 0
      %264 = vmatpush1.bf16.msra.mxu0 %v248
      %265 = vmatprep.subr.bf16.mxu0 0
      %266 = vmatpush1.bf16.msra.mxu0 0
      %267 = vmatprep.subr.bf16.mxu0 0
      %268 = vmatpush1.bf16.msra.mxu0 0
      %269 = vmatprep.subr.bf16.mxu0 0
      %270 = vmatpush1.bf16.msra.mxu0 0
      %271 = vmatprep.subr.bf16.mxu0 0
      %272 = vmatpush1.bf16.msra.mxu0 0
      %273 = vmatprep.subr.bf16.mxu0 0
      %274 = vmatpush1.bf16.msra.mxu0 0
      %275 = vmatprep.subr.bf16.mxu0 0
      %276 = vmatpush1.bf16.msra.mxu0 0
      %277 = vmatprep.subr.bf16.mxu0 0
      %278 = vmatpush1.bf16.msra.mxu0 0
      %279 = vmatprep.subr.bf16.mxu0 0
      %280 = vmatpush1.bf16.msra.mxu0 0
      %281 = vmatprep.subr.bf16.mxu0 0
      %282 = vmatpush1.bf16.msra.mxu0 0
      %283 = vmatprep.subr.bf16.mxu0 0
      %284 = vmatpush1.bf16.msra.mxu0 0
      %285 = vmatprep.subr.bf16.mxu0 0
      %286 = vmatpush1.bf16.msra.mxu0 0
      %287 = vmatprep.subr.bf16.mxu0 0
      %288 = vmatpush1.bf16.msra.mxu0 0
      %289 = vmatprep.mubr.bf16.mxu0 0
      %290 = vmatmul.mubr.bf16.gmra.mrb[0].mxu0 %v255
      %v291 = vpop.f32.mrb[0].mxu0
      %v292 = vadd.f32 %v227, %v291
      %v293 = vpop.f32.mrb[0].mxu0
      %v294 = vpop.f32.mrb[0].mxu0
      %v295 = vadd.f32 %v227, %v294
      %v296 = vpop.f32.mrb[0].mxu0
      %297 = vdwg.mxu0
      %298 = vst [vmem:[%s208] sm:$0xff] %v292
      %299 = vst [vmem:[%s208 + $0x8] sm:$0xff] %v295
      %s300 = smul.u32 2, %s19
      %p301 = scmp.lt.s32.totalorder %s18, 1
      %s302 = scalar_select %p301, %s18, 1
      %p303 = scmp.lt.s32.totalorder %s300, 1
      %s304 = scalar_select %p303, %s300, 1
      %s305 = smul.addr %s302, 2
      %s306 = sadd.s32 %s304, %s305
      %s307 = smul.addr %s306, 8
      %s308 = scalar_lea.vmem %s3, %s307
      // Predicated region
      $region33: #{mixsegnet_forward.3} parent=31 // pred_check
        %p309 = pneg %p116
      $region34: #{mixsegnet_forward.3} parent=31 // pred_check_branch
        %311 = sbr.rel (%p309) target = $region36
      $region35: #{mixsegnet_forward.3} parent=31 // pred_region
        %s312 = smul.u32 2, %s19
      $region36: #{mixsegnet_forward.3} parent=31 // pred_fallthru
        _
    $region32: #{mixsegnet_forward.3} parent=5 // pred_fallthru
      _
    %p313 = scmp.le.s32.totalorder 2, %s9
    // Predicated region
    $region37: #{mixsegnet_forward.3} parent=5 // pred_check
      %p314 = pneg %p313
    $region38: #{mixsegnet_forward.3} parent=5 // pred_check_branch
      %316 = sbr.rel (%p314) target = $region40
    $region39: #{mixsegnet_forward.3} parent=5 // pred_region
      %s317 = ssub.s32 %s9, 2
      // Predicated region
      $region41: #{mixsegnet_forward.3} parent=39 // pred_check
        %p318 = pneg %p122
      $region42: #{mixsegnet_forward.3} parent=39 // pred_check_branch
        %320 = sbr.rel (%p318) target = $region44
      $region43: #{mixsegnet_forward.3} parent=39 // pred_region
        %s321 = smul.u32 2, %s21
        %p322 = scmp.lt.s32.totalorder %s20, 1
        %s323 = scalar_select %p322, %s20, 1
        %p324 = scmp.lt.s32.totalorder %s321, 1
        %s325 = scalar_select %p324, %s321, 1
        %s326 = smul.addr %s323, 2
        %s327 = sadd.s32 %s325, %s326
        %s328 = smul.addr %s327, 8
        %s329 = scalar_lea.vmem %s3, %s328
      $region44: #{mixsegnet_forward.3} parent=39 // pred_fallthru
        _
    $region40: #{mixsegnet_forward.3} parent=5 // pred_fallthru
      _
  $region6: #{mixsegnet_forward.3} parent=0 // loop_footer
    %s13 = sadd.s32 1, %s9
  $region7: #{mixsegnet_forward.3} parent=0 // loop_footer_branch
    %8 = sbr.rel target = $region3
  $region8: #{mixsegnet_forward.3} parent=0 // loop_exit
    _

// kernel: mixsegnet_forward.5
$region0: #{mixsegnet_forward.5}
  #allocation0 [shape = 'u32[]', space=smem, size = 0x4, offset = 0x4, fixed_abs, tag = 'smem constant byte address 0x4 - core index']
  #allocation1 [shape = 'u32[144,128]{1,0:T(1,128)}', space=vmem, size = 0x12000, scoped, tag = 'internal scratch']
  %s0 = inlined_call_operand.vmem [shape: f32[2,16,128], index: 0, kind: input, shape index: {}]
  %s1 = inlined_call_operand.vmem [shape: f32[1,128], index: 1, kind: input, shape index: {}]
  %s2 = inlined_call_operand.vmem [shape: f32[1,128], index: 2, kind: input, shape index: {}]
  %s3 = inlined_call_operand.vmem [shape: bf16[128,128], index: 3, kind: input, shape index: {}]
  %s4 = inlined_call_operand.vmem [shape: f32[1,128], index: 4, kind: input, shape index: {}]
  %s5 = inlined_call_operand.vmem [shape: f32[2,16,128], index: 5, kind: output, shape index: {}]
  %s6 = sld [smem:[#allocation0]]
  $region53: #{mixsegnet_forward.5} parent=0
    _
  %s8 = ssub.s32 1, %s6
  %s9 = scalar_select 0, %s8, %s6
  loop: start=0, step=1, limit=4
  $region2: #{mixsegnet_forward.5} parent=0 // loop_pre_header
    _
  $region3: #{mixsegnet_forward.5} parent=0 // loop_header
    %s11 = sphi 0, %s15
    %p12 = scmp.ge.s32.totalorder %s11, 4
    %s18 = sphi 0, %s30
    %s19 = sphi 0, %s26
    %s20 = sphi 0, %s18
    %s21 = sphi 0, %s19
    %s22 = sphi 0, %s20
    %s23 = sphi 0, %s21
    %s35 = sphi 0, %s37
    %s38 = sphi 0, %s35
    %s39 = sphi 0, %s38
    %s55 = sphi 0, %s39
    %s59 = sphi 0, %s59
    %s61 = sphi 0, %s59
    %s62 = sphi 0, %s61
    %s76 = sphi 0, %s62
    %s80 = sphi 0, %s80
    %s82 = sphi 0, %s80
    %s83 = sphi 0, %s82
    %s97 = sphi 0, %s83
    %s101 = sphi 0, %s101
    %s103 = sphi 0, %s101
    %s104 = sphi 0, %s103
    %s118 = sphi 0, %s104
    %s122 = sphi 0, %s122
    %s124 = sphi 0, %s122
    %s125 = sphi 0, %s124
    %s139 = sphi 0, %s125
    %s147 = sphi 0, %s149
    %s150 = sphi 0, %s147
    %s151 = sphi 0, %s150
    %s167 = sphi 0, %s151
  $region4: #{mixsegnet_forward.5} parent=0 // loop_header_branch
    %14 = sbr.rel (%p12) target = $region8
  $region5: #{mixsegnet_forward.5} parent=0 // loop_body
    %s16 = ssub.s32 %s11, 1
    %s17 = ssub.s32 %s11, 2
    %s24 = sadd.s32 1, %s19
    %p25 = scmp.ge.s32.totalorder %s24, 1
    %s26 = scalar_select %p25, 0, %s24
    %s27 = sadd.s32 1, %s18
    %s28 = scalar_select %p25, %s27, %s18
    %p29 = scmp.ge.s32.totalorder %s28, 2
    %s30 = scalar_select %p29, 0, %s28
    %s31 = ssub.s32 %s18, %s30
    %s32 = ssub.s32 %s19, %s26
    %s33 = sor.u32 %s31, %s32
    %p34 = scmp.eq.s32.totalorder %s33, 0
    %s36 = sadd.s32 %s35, 1
    %s37 = scalar_select %p34, %s35, %s36
    %p40 = pneg %p34
    %p41 = scmp.eq.s32.totalorder %s11, 1
    %p42 = por %p40, %p41
    %p43 = scmp.ne.s32.totalorder %s35, %s38
    %p44 = scmp.eq.s32.totalorder %s11, 0
    %p45 = por %p43, %p44
    %p46 = scmp.ne.s32.totalorder %s35, %s38
    %p47 = scmp.eq.s32.totalorder %s16, 1
    %p48 = por %p46, %p47
    %p49 = scmp.ne.s32.totalorder %s38, %s39
    %p50 = scmp.eq.s32.totalorder %s16, 0
    %p51 = por %p49, %p50
    %p52 = scmp.ne.s32.totalorder %s38, %s39
    %p53 = scmp.eq.s32.totalorder %s17, 1
    %p54 = por %p52, %p53
    %p56 = scmp.ne.s32.totalorder %s39, %s55
    %p57 = scmp.eq.s32.totalorder %s17, 0
    %p58 = por %p56, %p57
    %s60 = sadd.s32 %s59, 1
    %p63 = scmp.eq.s32.totalorder %s11, 1
    %p64 = scmp.ne.s32.totalorder %s59, %s61
    %p65 = scmp.eq.s32.totalorder %s11, 0
    %p66 = por %p64, %p65
    %p67 = scmp.ne.s32.totalorder %s59, %s61
    %p68 = scmp.eq.s32.totalorder %s16, 1
    %p69 = por %p67, %p68
    %p70 = scmp.ne.s32.totalorder %s61, %s62
    %p71 = scmp.eq.s32.totalorder %s16, 0
    %p72 = por %p70, %p71
    %p73 = scmp.ne.s32.totalorder %s61, %s62
    %p74 = scmp.eq.s32.totalorder %s17, 1
    %p75 = por %p73, %p74
    %p77 = scmp.ne.s32.totalorder %s62, %s76
    %p78 = scmp.eq.s32.totalorder %s17, 0
    %p79 = por %p77, %p78
    %s81 = sadd.s32 %s80, 1
    %p84 = scmp.eq.s32.totalorder %s11, 1
    %p85 = scmp.ne.s32.totalorder %s80, %s82
    %p86 = scmp.eq.s32.totalorder %s11, 0
    %p87 = por %p85, %p86
    %p88 = scmp.ne.s32.totalorder %s80, %s82
    %p89 = scmp.eq.s32.totalorder %s16, 1
    %p90 = por %p88, %p89
    %p91 = scmp.ne.s32.totalorder %s82, %s83
    %p92 = scmp.eq.s32.totalorder %s16, 0
    %p93 = por %p91, %p92
    %p94 = scmp.ne.s32.totalorder %s82, %s83
    %p95 = scmp.eq.s32.totalorder %s17, 1
    %p96 = por %p94, %p95
    %p98 = scmp.ne.s32.totalorder %s83, %s97
    %p99 = scmp.eq.s32.totalorder %s17, 0
    %p100 = por %p98, %p99
    %s102 = sadd.s32 %s101, 1
    %p105 = scmp.eq.s32.totalorder %s11, 1
    %p106 = scmp.ne.s32.totalorder %s101, %s103
    %p107 = scmp.eq.s32.totalorder %s11, 0
    %p108 = por %p106, %p107
    %p109 = scmp.ne.s32.totalorder %s101, %s103
    %p110 = scmp.eq.s32.totalorder %s16, 1
    %p111 = por %p109, %p110
    %p112 = scmp.ne.s32.totalorder %s103, %s104
    %p113 = scmp.eq.s32.totalorder %s16, 0
    %p114 = por %p112, %p113
    %p115 = scmp.ne.s32.totalorder %s103, %s104
    %p116 = scmp.eq.s32.totalorder %s17, 1
    %p117 = por %p115, %p116
    %p119 = scmp.ne.s32.totalorder %s104, %s118
    %p120 = scmp.eq.s32.totalorder %s17, 0
    %p121 = por %p119, %p120
    %s123 = sadd.s32 %s122, 1
    %p126 = scmp.eq.s32.totalorder %s11, 1
    %p127 = scmp.ne.s32.totalorder %s122, %s124
    %p128 = scmp.eq.s32.totalorder %s11, 0
    %p129 = por %p127, %p128
    %p130 = scmp.ne.s32.totalorder %s122, %s124
    %p131 = scmp.eq.s32.totalorder %s16, 1
    %p132 = por %p130, %p131
    %p133 = scmp.ne.s32.totalorder %s124, %s125
    %p134 = scmp.eq.s32.totalorder %s16, 0
    %p135 = por %p133, %p134
    %p136 = scmp.ne.s32.totalorder %s124, %s125
    %p137 = scmp.eq.s32.totalorder %s17, 1
    %p138 = por %p136, %p137
    %p140 = scmp.ne.s32.totalorder %s125, %s139
    %p141 = scmp.eq.s32.totalorder %s17, 0
    %p142 = por %p140, %p141
    %s143 = ssub.s32 %s18, %s30
    %s144 = ssub.s32 %s19, %s26
    %s145 = sor.u32 %s143, %s144
    %p146 = scmp.eq.s32.totalorder %s145, 0
    %s148 = sadd.s32 %s147, 1
    %s149 = scalar_select %p146, %s147, %s148
    %p152 = pneg %p146
    %p153 = scmp.eq.s32.totalorder %s11, 1
    %p154 = por %p152, %p153
    %p155 = scmp.ne.s32.totalorder %s147, %s150
    %p156 = scmp.eq.s32.totalorder %s11, 0
    %p157 = por %p155, %p156
    %p158 = scmp.ne.s32.totalorder %s147, %s150
    %p159 = scmp.eq.s32.totalorder %s16, 1
    %p160 = por %p158, %p159
    %p161 = scmp.ne.s32.totalorder %s150, %s151
    %p162 = scmp.eq.s32.totalorder %s16, 0
    %p163 = por %p161, %p162
    %p164 = scmp.ne.s32.totalorder %s150, %s151
    %p165 = scmp.eq.s32.totalorder %s17, 1
    %p166 = por %p164, %p165
    %p168 = scmp.ne.s32.totalorder %s151, %s167
    %p169 = scmp.eq.s32.totalorder %s17, 0
    %p170 = por %p168, %p169
    %p171 = scmp.le.s32.totalorder 1, %s11
    %p172 = scmp.lt.s32.totalorder %s11, 3
    %p173 = pnand %p171, %p172
    %p174 = pneg %p173
    // Predicated region
    $region9: #{mixsegnet_forward.5} parent=5 // pred_check
      _
    $region10: #{mixsegnet_forward.5} parent=5 // pred_check_branch
      %176 = sbr.rel (%p173) target = $region12
    $region11: #{mixsegnet_forward.5} parent=5 // pred_region
      %s177 = ssub.s32 %s11, 1
      // Predicated region
      $region13: #{mixsegnet_forward.5} parent=11 // pred_check
        %p178 = pneg %p72
      $region14: #{mixsegnet_forward.5} parent=11 // pred_check_branch
        %180 = sbr.rel (%p178) target = $region16
      $region15: #{mixsegnet_forward.5} parent=11 // pred_region
        _
      $region16: #{mixsegnet_forward.5} parent=11 // pred_fallthru
        _
      // Predicated region
      $region17: #{mixsegnet_forward.5} parent=11 // pred_check
        %p181 = pneg %p93
      $region18: #{mixsegnet_forward.5} parent=11 // pred_check_branch
        %183 = sbr.rel (%p181) target = $region20
      $region19: #{mixsegnet_forward.5} parent=11 // pred_region
        _
      $region20: #{mixsegnet_forward.5} parent=11 // pred_fallthru
        _
      // Predicated region
      $region21: #{mixsegnet_forward.5} parent=11 // pred_check
        %p184 = pneg %p114
      $region22: #{mixsegnet_forward.5} parent=11 // pred_check_branch
        %186 = sbr.rel (%p184) target = $region24
      $region23: #{mixsegnet_forward.5} parent=11 // pred_region
        _
      $region24: #{mixsegnet_forward.5} parent=11 // pred_fallthru
        _
      // Predicated region
      $region25: #{mixsegnet_forward.5} parent=11 // pred_check
        %p187 = pneg %p135
      $region26: #{mixsegnet_forward.5} parent=11 // pred_check_branch
        %189 = sbr.rel (%p187) target = $region28
      $region27: #{mixsegnet_forward.5} parent=11 // pred_region
        _
      $region28: #{mixsegnet_forward.5} parent=11 // pred_fallthru
        _
    $region12: #{mixsegnet_forward.5} parent=5 // pred_fallthru
      _
    %p190 = scmp.lt.s32.totalorder %s11, 2
    // Predicated region
    $region29: #{mixsegnet_forward.5} parent=5 // pred_check
      %p191 = pneg %p190
    $region30: #{mixsegnet_forward.5} parent=5 // pred_check_branch
      %193 = sbr.rel (%p191) target = $region32
    $region31: #{mixsegnet_forward.5} parent=5 // pred_region
      // Predicated region
      $region33: #{mixsegnet_forward.5} parent=31 // pred_check
        %p194 = pneg %p45
      $region34: #{mixsegnet_forward.5} parent=31 // pred_check_branch
        %196 = sbr.rel (%p194) target = $region36
      $region35: #{mixsegnet_forward.5} parent=31 // pred_region
        %s197 = smul.u32 2, %s19
        %p198 = scmp.lt.s32.totalorder %s18, 1
        %s199 = scalar_select %p198, %s18, 1
        %p200 = scmp.lt.s32.totalorder %s197, 1
        %s201 = scalar_select %p200, %s197, 1
        %s202 = smul.addr %s199, 2
        %s203 = sadd.s32 %s201, %s202
        %s204 = smul.addr %s203, 8
        %s205 = scalar_lea.vmem %s0, %s204
        %s206 = smul.u32 2, %s19
      $region36: #{mixsegnet_forward.5} parent=31 // pred_fallthru
        _
    $region32: #{mixsegnet_forward.5} parent=5 // pred_fallthru
      _
    %p207 = scmp.le.s32.totalorder 1, %s11
    %p208 = scmp.lt.s32.totalorder %s11, 3
    %p209 = pnand %p207, %p208
    %p210 = pneg %p209
    // Predicated region
    $region37: #{mixsegnet_forward.5} parent=5 // pred_check
      _
    $region38: #{mixsegnet_forward.5} parent=5 // pred_check_branch
      %212 = sbr.rel (%p209) target = $region40
    $region39: #{mixsegnet_forward.5} parent=5 // pred_region
      %s213 = ssub.s32 %s11, 1
      %s214 = smul.u32 2, %s21
      %p215 = scmp.lt.s32.totalorder %s20, 1
      %s216 = scalar_select %p215, %s20, 1
      %p217 = scmp.lt.s32.totalorder %s214, 1
      %s218 = scalar_select %p217, %s214, 1
      %s219 = smul.addr %s216, 2
      %s220 = sadd.s32 %s218, %s219
      %s221 = smul.addr %s220, 8
      %s222 = scalar_lea.vmem %s0, %s221
      %p223 = pneg %p51
      %p224 = pneg %p48
      %p225 = pneg %p72
      %p226 = pneg %p69
      %p227 = pneg %p93
      %p228 = pneg %p90
      %p229 = pneg %p114
      %p230 = pneg %p111
      %p231 = pneg %p135
      %p232 = pneg %p132
      %p233 = pneg %p163
      %p234 = pneg %p160
      %s235 = smul.u32 2, %s21
      %p236 = scmp.lt.s32.totalorder %s20, 1
      %s237 = scalar_select %p236, %s20, 1
      %p238 = scmp.lt.s32.totalorder %s235, 1
      %s239 = scalar_select %p238, %s235, 1
      %s240 = smul.addr %s237, 2
      %s241 = sadd.s32 %s239, %s240
      %s242 = smul.addr %s241, 8
      %s243 = scalar_lea.vmem %s5, %s242
      %s244 = smul.u32 2, %s21
      %p245 = scmp.lt.s32.totalorder %s20, 1
      %s246 = scalar_select %p245, %s20, 1
      %p247 = scmp.lt.s32.totalorder %s244, 1
      %s248 = scalar_select %p247, %s244, 1
      %s249 = smul.addr %s246, 2
      %s250 = sadd.s32 %s248, %s249
      %s251 = smul.addr %s250, 8
      %s252 = scalar_lea.vmem %s0, %s251
      %s253 = smul.u32 2, %s21
      %s254 = smul.u32 2, %s21
      %p255 = scmp.lt.s32.totalorder %s20, 1
      %s256 = scalar_select %p255, %s20, 1
      %p257 = scmp.lt.s32.totalorder %s254, 1
      %s258 = scalar_select %p257, %s254, 1
      %s259 = smul.addr %s256, 2
      %s260 = sadd.s32 %s258, %s259
      %s261 = smul.addr %s260, 8
      %s262 = scalar_lea.vmem %s5, %s261
      %s263 = smul.u32 2, %s21
      %v265 = vld [vmem:[%s252] sm:$0xff]
      %v266 = vld [vmem:[%s252 + $0x8] sm:$0xff]
      %v267 = vld [vmem:[%s1] sm:$0x1]
      %v268 = vld [vmem:[%s2] sm:$0x1]
      %269 = vadd.xlane.f32.xlu0 %v265
      %v270 = vpop.xlane.xlu0 %269
      %271 = vadd.xlane.f32.xlu0 %v266
      %v272 = vpop.xlane.xlu0 %271
      %v273 = vrcp.pop 128.0
      %v274 = vmul.f32 %v270, %v273
      %v275 = vmul.f32 %v272, %v273
      %v276 = vsub.f32 %v265, %v274
      %v277 = vsub.f32 %v266, %v275
      %v278 = vmul.f32 %v276, %v276
      %v279 = vmul.f32 %v277, %v277
      %280 = vadd.xlane.f32.xlu0 %v278
      %v281 = vpop.xlane.xlu0 %280
      %282 = vadd.xlane.f32.xlu0 %v279
      %v283 = vpop.xlane.xlu0 %282
      %v284 = vmul.f32 %v281, %v273
      %v285 = vmul.f32 %v283, %v273
      %v286 = vadd.f32 %v284, 1e-05
      %v287 = vadd.f32 %v285, 1e-05
      %v288 = vrsqrt.pop %v286
      %v289 = vrsqrt.pop %v287
      %v290 = vmul.f32 %v276, %v288
      %v291 = vmul.f32 %v277, %v289
      %v293 = vlaneseq
      %v294 = vshrl.u32 %v293, 7
      %v295 = vsub.s32 0, %v294
      %v296 = vrot.slane %v267, %v295
      %v298 = vmul.f32 %v290, %v296
      %v299 = vmul.f32 %v291, %v296
      %v301 = vlaneseq
      %v302 = vshrl.u32 %v301, 7
      %v303 = vsub.s32 0, %v302
      %v304 = vrot.slane %v268, %v303
      %v306 = vadd.f32 %v298, %v304
      %v307 = vadd.f32 %v299, %v304
      %v308 = vpack.c.bf16 %v307, %v306
      %v309 = vld [vmem:[%s3] sm:$0xf]
      %v310 = vld [vmem:[%s3 + $0x4] sm:$0xf]
      %v311 = vld [vmem:[%s3 + $0x8] sm:$0xf]
      %v312 = vld [vmem:[%s3 + $0xc] sm:$0xf]
      %v313 = vld [vmem:[%s3 + $0x10] sm:$0xf]
      %v314 = vld [vmem:[%s3 + $0x14] sm:$0xf]
      %v315 = vld [vmem:[%s3 + $0x18] sm:$0xf]
      %v316 = vld [vmem:[%s3 + $0x1c] sm:$0xf]
      %v317 = vld [vmem:[%s3 + $0x20] sm:$0xf]
      %v318 = vld [vmem:[%s3 + $0x24] sm:$0xf]
      %v319 = vld [vmem:[%s3 + $0x28] sm:$0xf]
      %v320 = vld [vmem:[%s3 + $0x2c] sm:$0xf]
      %v321 = vld [vmem:[%s3 + $0x30] sm:$0xf]
      %v322 = vld [vmem:[%s3 + $0x34] sm:$0xf]
      %v323 = vld [vmem:[%s3 + $0x38] sm:$0xf]
      %v324 = vld [vmem:[%s3 + $0x3c] sm:$0xf]
      %v325 = vld [vmem:[%s4] sm:$0x1]
      %v327 = vlaneseq
      %v328 = vshrl.u32 %v327, 7
      %v329 = vsub.s32 0, %v328
      %v330 = vrot.slane %v325, %v329
      %v348 = vunpack.c.l.b16 %v309
      %v349 = vunpack.c.l.b16 %v310
      %v350 = vunpack.c.l.b16 %v311
      %v351 = vunpack.c.l.b16 %v312
      %v352 = vunpack.c.l.b16 %v313
      %v353 = vunpack.c.l.b16 %v314
      %v354 = vunpack.c.l.b16 %v315
      %v355 = vunpack.c.l.b16 %v316
      %v356 = vunpack.c.l.b16 %v317
      %v357 = vunpack.c.l.b16 %v318
      %v358 = vunpack.c.l.b16 %v319
      %v359 = vunpack.c.l.b16 %v320
      %v360 = vunpack.c.l.b16 %v321
      %v361 = vunpack.c.l.b16 %v322
      %v362 = vunpack.c.l.b16 %v323
      %v363 = vunpack.c.l.b16 %v324
      %v364 = vpack.c.b16 %v349, %v348
      %v365 = vpack.c.b16 %v351, %v350
      %v366 = vpack.c.b16 %v353, %v352
      %v367 = vpack.c.b16 %v355, %v354
      %v368 = vpack.c.b16 %v357, %v356
      %v369 = vpack.c.b16 %v359, %v358
      %v370 = vpack.c.b16 %v361, %v360
      %v371 = vpack.c.b16 %v363, %v362
      %380 = vmatprep.subr.bf16.mxu0 0
      %381 = vmatpush1.bf16.msra.mxu0 %v364
      %382 = vmatprep.subr.bf16.mxu0 0
      %383 = vmatpush1.bf16.msra.mxu0 %v365
      %384 = vmatprep.subr.bf16.mxu0 0
      %385 = vmatpush1.bf16.msra.mxu0 %v366
      %386 = vmatprep.subr.bf16.mxu0 0
      %387 = vmatpush1.bf16.msra.mxu0 %v367
      %388 = vmatprep.subr.bf16.mxu0 0
      %389 = vmatpush1.bf16.msra.mxu0 %v368
      %390 = vmatprep.subr.bf16.mxu0 0
      %391 = vmatpush1.bf16.msra.mxu0 %v369
      %392 = vmatprep.subr.bf16.mxu0 0
      %393 = vmatpush1.bf16.msra.mxu0 %v370
      %394 = vmatprep.subr.bf16.mxu0 0
      %395 = vmatpush1.bf16.msra.mxu0 %v371
      %396 = vmatprep.subr.bf16.mxu0 0
      %397 = vmatpush1.bf16.msra.mxu0 0
      %398 = vmatprep.subr.bf16.mxu0 0
      %399 = vmatpush1.bf16.msra.mxu0 0
      %400 = vmatprep.subr.bf16.mxu0 0
      %401 = vmatpush1.bf16.msra.mxu0 0
      %402 = vmatprep.subr.bf16.mxu0 0
      %403 = vmatpush1.bf16.msra.mxu0 0
      %404 = vmatprep.subr.bf16.mxu0 0
      %405 = vmatpush1.bf16.msra.mxu0 0
      %406 = vmatprep.subr.bf16.mxu0 0
      %407 = vmatpush1.bf16.msra.mxu0 0
      %408 = vmatprep.subr.bf16.mxu0 0
      %409 = vmatpush1.bf16.msra.mxu0 0
      %410 = vmatprep.subr.bf16.mxu0 0
      %411 = vmatpush1.bf16.msra.mxu0 0
      %412 = vmatprep.mubr.bf16.mxu0 0
      %413 = vmatmul.mubr.bf16.gmra.mrb[0].mxu0 %v308
      %v414 = vpop.f32.mrb[0].mxu0
      %v415 = vadd.f32 %v330, %v414
      %v416 = vpop.f32.mrb[0].mxu0
      %v417 = vpop.f32.mrb[0].mxu0
      %v418 = vadd.f32 %v330, %v417
      %v419 = vpop.f32.mrb[0].mxu0
      %420 = vdwg.mxu0
      %421 = vst [vmem:[%s262] sm:$0xff] %v415
      %422 = vst [vmem:[%s262 + $0x8] sm:$0xff] %v418
      %s423 = smul.u32 2, %s21
      %p424 = scmp.lt.s32.totalorder %s20, 1
      %s425 = scalar_select %p424, %s20, 1
      %p426 = scmp.lt.s32.totalorder %s423, 1
      %s427 = scalar_select %p426, %s423, 1
      %s428 = smul.addr %s425, 2
      %s429 = sadd.s32 %s427, %s428
      %s430 = smul.addr %s429, 8
      %s431 = scalar_lea.vmem %s5, %s430
      // Predicated region
      $region41: #{mixsegnet_forward.5} parent=39 // pred_check
        %p432 = pneg %p160
      $region42: #{mixsegnet_forward.5} parent=39 // pred_check_branch
        %434 = sbr.rel (%p432) target = $region44
      $region43: #{mixsegnet_forward.5} parent=39 // pred_region
        %s435 = smul.u32 2, %s21
      $region44: #{mixsegnet_forward.5} parent=39 // pred_fallthru
        _
    $region40: #{mixsegnet_forward.5} parent=5 // pred_fallthru
      _
    %p436 = scmp.le.s32.totalorder 2, %s11
    // Predicated region
    $region45: #{mixsegnet_forward.5} parent=5 // pred_check
      %p437 = pneg %p436
    $region46: #{mixsegnet_forward.5} parent=5 // pred_check_branch
      %439 = sbr.rel (%p437) target = $region48
    $region47: #{mixsegnet_forward.5} parent=5 // pred_region
      %s440 = ssub.s32 %s11, 2
      // Predicated region
      $region49: #{mixsegnet_forward.5} parent=47 // pred_check
        %p441 = pneg %p166
      $region50: #{mixsegnet_forward.5} parent=47 // pred_check_branch
        %443 = sbr.rel (%p441) target = $region52
      $region51: #{mixsegnet_forward.5} parent=47 // pred_region
        %s444 = smul.u32 2, %s23
        %p445 = scmp.lt.s32.totalorder %s22, 1
        %s446 = scalar_select %p445, %s22, 1
        %p447 = scmp.lt.s32.totalorder %s444, 1
        %s448 = scalar_select %p447, %s444, 1
        %s449 = smul.addr %s446, 2
        %s450 = sadd.s32 %s448, %s449
        %s451 = smul.addr %s450, 8
        %s452 = scalar_lea.vmem %s5, %s451
      $region52: #{mixsegnet_forward.5} parent=47 // pred_fallthru
        _
    $region48: #{mixsegnet_forward.5} parent=5 // pred_fallthru
      _
  $region6: #{mixsegnet_forward.5} parent=0 // loop_footer
    %s15 = sadd.s32 1, %s11
  $region7: #{mixsegnet_forward.5} parent=0 // loop_footer_branch
    %10 = sbr.rel target = $region3
  $region8: #{mixsegnet_forward.5} parent=0 // loop_exit
    _

// kernel: mixsegnet_forward.4
$region0: #{mixsegnet_forward.4}
  #allocation0 [shape = 'u32[]', space=smem, size = 0x4, offset = 0x4, fixed_abs, tag = 'smem constant byte address 0x4 - core index']
  #allocation1 [shape = 'u32[144,128]{1,0:T(1,128)}', space=vmem, size = 0x12000, scoped, tag = 'internal scratch']
  %s0 = inlined_call_operand.vmem [shape: f32[2,16,128], index: 0, kind: input, shape index: {}]
  %s1 = inlined_call_operand.vmem [shape: f32[2,1,128], index: 1, kind: input, shape index: {}]
  %s2 = inlined_call_operand.vmem [shape: f32[2,1,128], index: 2, kind: input, shape index: {}]
  %s3 = inlined_call_operand.vmem [shape: bf16[2,64,16], index: 3, kind: input, shape index: {}]
  %s4 = inlined_call_operand.vmem [shape: f32[2,64,1], index: 4, kind: input, shape index: {}]
  %s5 = inlined_call_operand.vmem [shape: bf16[2,16,64], index: 5, kind: input, shape index: {}]
  %s6 = inlined_call_operand.vmem [shape: f32[2,16,1], index: 6, kind: input, shape index: {}]
  %s7 = inlined_call_operand.vmem [shape: f32[2,1,128], index: 7, kind: input, shape index: {}]
  %s8 = inlined_call_operand.vmem [shape: f32[2,1,128], index: 8, kind: input, shape index: {}]
  %s9 = inlined_call_operand.vmem [shape: bf16[2,128,512], index: 9, kind: input, shape index: {}]
  %s10 = inlined_call_operand.vmem [shape: f32[2,1,512], index: 10, kind: input, shape index: {}]
  %s11 = inlined_call_operand.vmem [shape: bf16[2,512,128], index: 11, kind: input, shape index: {}]
  %s12 = inlined_call_operand.vmem [shape: f32[2,1,128], index: 12, kind: input, shape index: {}]
  %s13 = inlined_call_operand.vmem [shape: f32[2,16,128], index: 13, kind: output, shape index: {}]
  %s14 = sld [smem:[#allocation0]]
  $region89: #{mixsegnet_forward.4} parent=0
    _
  %s16 = ssub.s32 1, %s14
  %s17 = scalar_select 0, %s16, %s14
  loop: start=0, step=1, limit=6
  $region2: #{mixsegnet_forward.4} parent=0 // loop_pre_header
    _
  $region3: #{mixsegnet_forward.4} parent=0 // loop_header
    %s19 = sphi 0, %s23
    %p20 = scmp.ge.s32.totalorder %s19, 6
    %s26 = sphi 0, %s38
    %s27 = sphi 0, %s34
    %s28 = sphi 0, %s26
    %s29 = sphi 0, %s27
    %s30 = sphi 0, %s28
    %s31 = sphi 0, %s29
    %s41 = sphi 0, %s43
    %s44 = sphi 0, %s41
    %s45 = sphi 0, %s44
    %s61 = sphi 0, %s45
    %s67 = sphi 0, %s69
    %s70 = sphi 0, %s67
    %s71 = sphi 0, %s70
    %s87 = sphi 0, %s71
    %s93 = sphi 0, %s95
    %s96 = sphi 0, %s93
    %s97 = sphi 0, %s96
    %s113 = sphi 0, %s97
    %s119 = sphi 0, %s121
    %s122 = sphi 0, %s119
    %s123 = sphi 0, %s122
    %s139 = sphi 0, %s123
    %s145 = sphi 0, %s147
    %s148 = sphi 0, %s145
    %s149 = sphi 0, %s148
    %s165 = sphi 0, %s149
    %s171 = sphi 0, %s173
    %s174 = sphi 0, %s171
    %s175 = sphi 0, %s174
    %s191 = sphi 0, %s175
    %s197 = sphi 0, %s199
    %s200 = sphi 0, %s197
    %s201 = sphi 0, %s200
    %s217 = sphi 0, %s201
    %s223 = sphi 0, %s225
    %s226 = sphi 0, %s223
    %s227 = sphi 0, %s226
    %s243 = sphi 0, %s227
    %s249 = sphi 0, %s251
    %s252 = sphi 0, %s249
    %s253 = sphi 0, %s252
    %s269 = sphi 0, %s253
    %s275 = sphi 0, %s277
    %s278 = sphi 0, %s275
    %s279 = sphi 0, %s278
    %s295 = sphi 0, %s279
    %s301 = sphi 0, %s303
    %s304 = sphi 0, %s301
    %s305 = sphi 0, %s304
    %s321 = sphi 0, %s305
    %s327 = sphi 0, %s329
    %s330 = sphi 0, %s327
    %s331 = sphi 0, %s330
    %s347 = sphi 0, %s331
    %s353 = sphi 0, %s355
    %s356 = sphi 0, %s353
    %s357 = sphi 0, %s356
    %s373 = sphi 0, %s357
    %s379 = sphi 0, %s381
    %s382 = sphi 0, %s379
    %s383 = sphi 0, %s382
    %s399 = sphi 0, %s383
  $region4: #{mixsegnet_forward.4} parent=0 // loop_header_branch
    %22 = sbr.rel (%p20) target = $region8
  $region5: #{mixsegnet_forward.4} parent=0 // loop_body
    %s24 = ssub.s32 %s19, 1
    %s25 = ssub.s32 %s19, 2
    %s32 = sadd.s32 1, %s27
    %p33 = scmp.ge.s32.totalorder %s32, 2
    %s34 = scalar_select %p33, 0, %s32
    %s35 = sadd.s32 1, %s26
    %s36 = scalar_select %p33, %s35, %s26
    %p37 = scmp.ge.s32.totalorder %s36, 2
    %s38 = scalar_select %p37, 0, %s36
    %s39 = ssub.s32 %s26, %s38
    %p40 = scmp.eq.s32.totalorder %s39, 0
    %s42 = sadd.s32 %s41, 1
    %s43 = scalar_select %p40, %s41, %s42
    %p46 = pneg %p40
    %p47 = scmp.eq.s32.totalorder %s19, 3
    %p48 = por %p46, %p47
    %p49 = scmp.ne.s32.totalorder %s41, %s44
    %p50 = scmp.eq.s32.totalorder %s19, 0
    %p51 = por %p49, %p50
    %p52 = scmp.ne.s32.totalorder %s41, %s44
    %p53 = scmp.eq.s32.totalorder %s24, 3
    %p54 = por %p52, %p53
    %p55 = scmp.ne.s32.totalorder %s44, %s45
    %p56 = scmp.eq.s32.totalorder %s24, 0
    %p57 = por %p55, %p56
    %p58 = scmp.ne.s32.totalorder %s44, %s45
    %p59 = scmp.eq.s32.totalorder %s25, 3
    %p60 = por %p58, %p59
    %p62 = scmp.ne.s32.totalorder %s45, %s61
    %p63 = scmp.eq.s32.totalorder %s25, 0
    %p64 = por %p62, %p63
    %s65 = ssub.s32 %s27, %s34
    %p66 = scmp.eq.s32.totalorder %s65, 0
    %s68 = sadd.s32 %s67, 1
    %s69 = scalar_select %p66, %s67, %s68
    %p72 = pneg %p66
    %p73 = scmp.eq.s32.totalorder %s19, 3
    %p74 = por %p72, %p73
    %p75 = scmp.ne.s32.totalorder %s67, %s70
    %p76 = scmp.eq.s32.totalorder %s19, 0
    %p77 = por %p75, %p76
    %p78 = scmp.ne.s32.totalorder %s67, %s70
    %p79 = scmp.eq.s32.totalorder %s24, 3
    %p80 = por %p78, %p79
    %p81 = scmp.ne.s32.totalorder %s70, %s71
    %p82 = scmp.eq.s32.totalorder %s24, 0
    %p83 = por %p81, %p82
    %p84 = scmp.ne.s32.totalorder %s70, %s71
    %p85 = scmp.eq.s32.totalorder %s25, 3
    %p86 = por %p84, %p85
    %p88 = scmp.ne.s32.totalorder %s71, %s87
    %p89 = scmp.eq.s32.totalorder %s25, 0
    %p90 = por %p88, %p89
    %s91 = ssub.s32 %s27, %s34
    %p92 = scmp.eq.s32.totalorder %s91, 0
    %s94 = sadd.s32 %s93, 1
    %s95 = scalar_select %p92, %s93, %s94
    %p98 = pneg %p92
    %p99 = scmp.eq.s32.totalorder %s19, 3
    %p100 = por %p98, %p99
    %p101 = scmp.ne.s32.totalorder %s93, %s96
    %p102 = scmp.eq.s32.totalorder %s19, 0
    %p103 = por %p101, %p102
    %p104 = scmp.ne.s32.totalorder %s93, %s96
    %p105 = scmp.eq.s32.totalorder %s24, 3
    %p106 = por %p104, %p105
    %p107 = scmp.ne.s32.totalorder %s96, %s97
    %p108 = scmp.eq.s32.totalorder %s24, 0
    %p109 = por %p107, %p108
    %p110 = scmp.ne.s32.totalorder %s96, %s97
    %p111 = scmp.eq.s32.totalorder %s25, 3
    %p112 = por %p110, %p111
    %p114 = scmp.ne.s32.totalorder %s97, %s113
    %p115 = scmp.eq.s32.totalorder %s25, 0
    %p116 = por %p114, %p115
    %s117 = ssub.s32 %s27, %s34
    %p118 = scmp.eq.s32.totalorder %s117, 0
    %s120 = sadd.s32 %s119, 1
    %s121 = scalar_select %p118, %s119, %s120
    %p124 = pneg %p118
    %p125 = scmp.eq.s32.totalorder %s19, 3
    %p126 = por %p124, %p125
    %p127 = scmp.ne.s32.totalorder %s119, %s122
    %p128 = scmp.eq.s32.totalorder %s19, 0
    %p129 = por %p127, %p128
    %p130 = scmp.ne.s32.totalorder %s119, %s122
    %p131 = scmp.eq.s32.totalorder %s24, 3
    %p132 = por %p130, %p131
    %p133 = scmp.ne.s32.totalorder %s122, %s123
    %p134 = scmp.eq.s32.totalorder %s24, 0
    %p135 = por %p133, %p134
    %p136 = scmp.ne.s32.totalorder %s122, %s123
    %p137 = scmp.eq.s32.totalorder %s25, 3
    %p138 = por %p136, %p137
    %p140 = scmp.ne.s32.totalorder %s123, %s139
    %p141 = scmp.eq.s32.totalorder %s25, 0
    %p142 = por %p140, %p141
    %s143 = ssub.s32 %s27, %s34
    %p144 = scmp.eq.s32.totalorder %s143, 0
    %s146 = sadd.s32 %s145, 1
    %s147 = scalar_select %p144, %s145, %s146
    %p150 = pneg %p144
    %p151 = scmp.eq.s32.totalorder %s19, 3
    %p152 = por %p150, %p151
    %p153 = scmp.ne.s32.totalorder %s145, %s148
    %p154 = scmp.eq.s32.totalorder %s19, 0
    %p155 = por %p153, %p154
    %p156 = scmp.ne.s32.totalorder %s145, %s148
    %p157 = scmp.eq.s32.totalorder %s24, 3
    %p158 = por %p156, %p157
    %p159 = scmp.ne.s32.totalorder %s148, %s149
    %p160 = scmp.eq.s32.totalorder %s24, 0
    %p161 = por %p159, %p160
    %p162 = scmp.ne.s32.totalorder %s148, %s149
    %p163 = scmp.eq.s32.totalorder %s25, 3
    %p164 = por %p162, %p163
    %p166 = scmp.ne.s32.totalorder %s149, %s165
    %p167 = scmp.eq.s32.totalorder %s25, 0
    %p168 = por %p166, %p167
    %s169 = ssub.s32 %s27, %s34
    %p170 = scmp.eq.s32.totalorder %s169, 0
    %s172 = sadd.s32 %s171, 1
    %s173 = scalar_select %p170, %s171, %s172
    %p176 = pneg %p170
    %p177 = scmp.eq.s32.totalorder %s19, 3
    %p178 = por %p176, %p177
    %p179 = scmp.ne.s32.totalorder %s171, %s174
    %p180 = scmp.eq.s32.totalorder %s19, 0
    %p181 = por %p179, %p180
    %p182 = scmp.ne.s32.totalorder %s171, %s174
    %p183 = scmp.eq.s32.totalorder %s24, 3
    %p184 = por %p182, %p183
    %p185 = scmp.ne.s32.totalorder %s174, %s175
    %p186 = scmp.eq.s32.totalorder %s24, 0
    %p187 = por %p185, %p186
    %p188 = scmp.ne.s32.totalorder %s174, %s175
    %p189 = scmp.eq.s32.totalorder %s25, 3
    %p190 = por %p188, %p189
    %p192 = scmp.ne.s32.totalorder %s175, %s191
    %p193 = scmp.eq.s32.totalorder %s25, 0
    %p194 = por %p192, %p193
    %s195 = ssub.s32 %s27, %s34
    %p196 = scmp.eq.s32.totalorder %s195, 0
    %s198 = sadd.s32 %s197, 1
    %s199 = scalar_select %p196, %s197, %s198
    %p202 = pneg %p196
    %p203 = scmp.eq.s32.totalorder %s19, 3
    %p204 = por %p202, %p203
    %p205 = scmp.ne.s32.totalorder %s197, %s200
    %p206 = scmp.eq.s32.totalorder %s19, 0
    %p207 = por %p205, %p206
    %p208 = scmp.ne.s32.totalorder %s197, %s200
    %p209 = scmp.eq.s32.totalorder %s24, 3
    %p210 = por %p208, %p209
    %p211 = scmp.ne.s32.totalorder %s200, %s201
    %p212 = scmp.eq.s32.totalorder %s24, 0
    %p213 = por %p211, %p212
    %p214 = scmp.ne.s32.totalorder %s200, %s201
    %p215 = scmp.eq.s32.totalorder %s25, 3
    %p216 = por %p214, %p215
    %p218 = scmp.ne.s32.totalorder %s201, %s217
    %p219 = scmp.eq.s32.totalorder %s25, 0
    %p220 = por %p218, %p219
    %s221 = ssub.s32 %s27, %s34
    %p222 = scmp.eq.s32.totalorder %s221, 0
    %s224 = sadd.s32 %s223, 1
    %s225 = scalar_select %p222, %s223, %s224
    %p228 = pneg %p222
    %p229 = scmp.eq.s32.totalorder %s19, 3
    %p230 = por %p228, %p229
    %p231 = scmp.ne.s32.totalorder %s223, %s226
    %p232 = scmp.eq.s32.totalorder %s19, 0
    %p233 = por %p231, %p232
    %p234 = scmp.ne.s32.totalorder %s223, %s226
    %p235 = scmp.eq.s32.totalorder %s24, 3
    %p236 = por %p234, %p235
    %p237 = scmp.ne.s32.totalorder %s226, %s227
    %p238 = scmp.eq.s32.totalorder %s24, 0
    %p239 = por %p237, %p238
    %p240 = scmp.ne.s32.totalorder %s226, %s227
    %p241 = scmp.eq.s32.totalorder %s25, 3
    %p242 = por %p240, %p241
    %p244 = scmp.ne.s32.totalorder %s227, %s243
    %p245 = scmp.eq.s32.totalorder %s25, 0
    %p246 = por %p244, %p245
    %s247 = ssub.s32 %s27, %s34
    %p248 = scmp.eq.s32.totalorder %s247, 0
    %s250 = sadd.s32 %s249, 1
    %s251 = scalar_select %p248, %s249, %s250
    %p254 = pneg %p248
    %p255 = scmp.eq.s32.totalorder %s19, 3
    %p256 = por %p254, %p255
    %p257 = scmp.ne.s32.totalorder %s249, %s252
    %p258 = scmp.eq.s32.totalorder %s19, 0
    %p259 = por %p257, %p258
    %p260 = scmp.ne.s32.totalorder %s249, %s252
    %p261 = scmp.eq.s32.totalorder %s24, 3
    %p262 = por %p260, %p261
    %p263 = scmp.ne.s32.totalorder %s252, %s253
    %p264 = scmp.eq.s32.totalorder %s24, 0
    %p265 = por %p263, %p264
    %p266 = scmp.ne.s32.totalorder %s252, %s253
    %p267 = scmp.eq.s32.totalorder %s25, 3
    %p268 = por %p266, %p267
    %p270 = scmp.ne.s32.totalorder %s253, %s269
    %p271 = scmp.eq.s32.totalorder %s25, 0
    %p272 = por %p270, %p271
    %s273 = ssub.s32 %s27, %s34
    %p274 = scmp.eq.s32.totalorder %s273, 0
    %s276 = sadd.s32 %s275, 1
    %s277 = scalar_select %p274, %s275, %s276
    %p280 = pneg %p274
    %p281 = scmp.eq.s32.totalorder %s19, 3
    %p282 = por %p280, %p281
    %p283 = scmp.ne.s32.totalorder %s275, %s278
    %p284 = scmp.eq.s32.totalorder %s19, 0
    %p285 = por %p283, %p284
    %p286 = scmp.ne.s32.totalorder %s275, %s278
    %p287 = scmp.eq.s32.totalorder %s24, 3
    %p288 = por %p286, %p287
    %p289 = scmp.ne.s32.totalorder %s278, %s279
    %p290 = scmp.eq.s32.totalorder %s24, 0
    %p291 = por %p289, %p290
    %p292 = scmp.ne.s32.totalorder %s278, %s279
    %p293 = scmp.eq.s32.totalorder %s25, 3
    %p294 = por %p292, %p293
    %p296 = scmp.ne.s32.totalorder %s279, %s295
    %p297 = scmp.eq.s32.totalorder %s25, 0
    %p298 = por %p296, %p297
    %s299 = ssub.s32 %s27, %s34
    %p300 = scmp.eq.s32.totalorder %s299, 0
    %s302 = sadd.s32 %s301, 1
    %s303 = scalar_select %p300, %s301, %s302
    %p306 = pneg %p300
    %p307 = scmp.eq.s32.totalorder %s19, 3
    %p308 = por %p306, %p307
    %p309 = scmp.ne.s32.totalorder %s301, %s304
    %p310 = scmp.eq.s32.totalorder %s19, 0
    %p311 = por %p309, %p310
    %p312 = scmp.ne.s32.totalorder %s301, %s304
    %p313 = scmp.eq.s32.totalorder %s24, 3
    %p314 = por %p312, %p313
    %p315 = scmp.ne.s32.totalorder %s304, %s305
    %p316 = scmp.eq.s32.totalorder %s24, 0
    %p317 = por %p315, %p316
    %p318 = scmp.ne.s32.totalorder %s304, %s305
    %p319 = scmp.eq.s32.totalorder %s25, 3
    %p320 = por %p318, %p319
    %p322 = scmp.ne.s32.totalorder %s305, %s321
    %p323 = scmp.eq.s32.totalorder %s25, 0
    %p324 = por %p322, %p323
    %s325 = ssub.s32 %s27, %s34
    %p326 = scmp.eq.s32.totalorder %s325, 0
    %s328 = sadd.s32 %s327, 1
    %s329 = scalar_select %p326, %s327, %s328
    %p332 = pneg %p326
    %p333 = scmp.eq.s32.totalorder %s19, 3
    %p334 = por %p332, %p333
    %p335 = scmp.ne.s32.totalorder %s327, %s330
    %p336 = scmp.eq.s32.totalorder %s19, 0
    %p337 = por %p335, %p336
    %p338 = scmp.ne.s32.totalorder %s327, %s330
    %p339 = scmp.eq.s32.totalorder %s24, 3
    %p340 = por %p338, %p339
    %p341 = scmp.ne.s32.totalorder %s330, %s331
    %p342 = scmp.eq.s32.totalorder %s24, 0
    %p343 = por %p341, %p342
    %p344 = scmp.ne.s32.totalorder %s330, %s331
    %p345 = scmp.eq.s32.totalorder %s25, 3
    %p346 = por %p344, %p345
    %p348 = scmp.ne.s32.totalorder %s331, %s347
    %p349 = scmp.eq.s32.totalorder %s25, 0
    %p350 = por %p348, %p349
    %s351 = ssub.s32 %s27, %s34
    %p352 = scmp.eq.s32.totalorder %s351, 0
    %s354 = sadd.s32 %s353, 1
    %s355 = scalar_select %p352, %s353, %s354
    %p358 = pneg %p352
    %p359 = scmp.eq.s32.totalorder %s19, 3
    %p360 = por %p358, %p359
    %p361 = scmp.ne.s32.totalorder %s353, %s356
    %p362 = scmp.eq.s32.totalorder %s19, 0
    %p363 = por %p361, %p362
    %p364 = scmp.ne.s32.totalorder %s353, %s356
    %p365 = scmp.eq.s32.totalorder %s24, 3
    %p366 = por %p364, %p365
    %p367 = scmp.ne.s32.totalorder %s356, %s357
    %p368 = scmp.eq.s32.totalorder %s24, 0
    %p369 = por %p367, %p368
    %p370 = scmp.ne.s32.totalorder %s356, %s357
    %p371 = scmp.eq.s32.totalorder %s25, 3
    %p372 = por %p370, %p371
    %p374 = scmp.ne.s32.totalorder %s357, %s373
    %p375 = scmp.eq.s32.totalorder %s25, 0
    %p376 = por %p374, %p375
    %s377 = ssub.s32 %s26, %s38
    %p378 = scmp.eq.s32.totalorder %s377, 0
    %s380 = sadd.s32 %s379, 1
    %s381 = scalar_select %p378, %s379, %s380
    %p384 = pneg %p378
    %p385 = scmp.eq.s32.totalorder %s19, 3
    %p386 = por %p384, %p385
    %p387 = scmp.ne.s32.totalorder %s379, %s382
    %p388 = scmp.eq.s32.totalorder %s19, 0
    %p389 = por %p387, %p388
    %p390 = scmp.ne.s32.totalorder %s379, %s382
    %p391 = scmp.eq.s32.totalorder %s24, 3
    %p392 = por %p390, %p391
    %p393 = scmp.ne.s32.totalorder %s382, %s383
    %p394 = scmp.eq.s32.totalorder %s24, 0
    %p395 = por %p393, %p394
    %p396 = scmp.ne.s32.totalorder %s382, %s383
    %p397 = scmp.eq.s32.totalorder %s25, 3
    %p398 = por %p396, %p397
    %p400 = scmp.ne.s32.totalorder %s383, %s399
    %p401 = scmp.eq.s32.totalorder %s25, 0
    %p402 = por %p400, %p401
    %p403 = scmp.le.s32.totalorder 1, %s19
    %p404 = scmp.lt.s32.totalorder %s19, 5
    %p405 = pnand %p403, %p404
    %p406 = pneg %p405
    // Predicated region
    $region9: #{mixsegnet_forward.4} parent=5 // pred_check
      _
    $region10: #{mixsegnet_forward.4} parent=5 // pred_check_branch
      %408 = sbr.rel (%p405) target = $region12
    $region11: #{mixsegnet_forward.4} parent=5 // pred_region
      %s409 = ssub.s32 %s19, 1
    $region12: #{mixsegnet_forward.4} parent=5 // pred_fallthru
      _
    %p410 = scmp.lt.s32.totalorder %s19, 4
    // Predicated region
    $region13: #{mixsegnet_forward.4} parent=5 // pred_check
      %p411 = pneg %p410
    $region14: #{mixsegnet_forward.4} parent=5 // pred_check_branch
      %413 = sbr.rel (%p411) target = $region16
    $region15: #{mixsegnet_forward.4} parent=5 // pred_region
      // Predicated region
      $region17: #{mixsegnet_forward.4} parent=15 // pred_check
        %p414 = pneg %p51
      $region18: #{mixsegnet_forward.4} parent=15 // pred_check_branch
        %416 = sbr.rel (%p414) target = $region20
      $region19: #{mixsegnet_forward.4} parent=15 // pred_region
        %p417 = scmp.lt.s32.totalorder %s26, 1
        %s418 = scalar_select %p417, %s26, 1
        %s419 = smul.addr %s418, 2
        %s420 = smul.addr %s419, 8
        %s421 = scalar_lea.vmem %s0, %s420
      $region20: #{mixsegnet_forward.4} parent=15 // pred_fallthru
        _
      // Predicated region
      $region21: #{mixsegnet_forward.4} parent=15 // pred_check
        %p422 = pneg %p77
      $region22: #{mixsegnet_forward.4} parent=15 // pred_check_branch
        %424 = sbr.rel (%p422) target = $region24
      $region23: #{mixsegnet_forward.4} parent=15 // pred_region
        %p425 = scmp.lt.s32.totalorder %s27, 1
        %s426 = scalar_select %p425, %s27, 1
        %s427 = scalar_lea.vmem %s1, %s426
      $region24: #{mixsegnet_forward.4} parent=15 // pred_fallthru
        _
      // Predicated region
      $region25: #{mixsegnet_forward.4} parent=15 // pred_check
        %p428 = pneg %p103
      $region26: #{mixsegnet_forward.4} parent=15 // pred_check_branch
        %430 = sbr.rel (%p428) target = $region28
      $region27: #{mixsegnet_forward.4} parent=15 // pred_region
        %p431 = scmp.lt.s32.totalorder %s27, 1
        %s432 = scalar_select %p431, %s27, 1
        %s433 = scalar_lea.vmem %s2, %s432
      $region28: #{mixsegnet_forward.4} parent=15 // pred_fallthru
        _
      // Predicated region
      $region29: #{mixsegnet_forward.4} parent=15 // pred_check
        %p434 = pneg %p129
      $region30: #{mixsegnet_forward.4} parent=15 // pred_check_branch
        %436 = sbr.rel (%p434) target = $region32
      $region31: #{mixsegnet_forward.4} parent=15 // pred_region
        %p437 = scmp.lt.s32.totalorder %s27, 1
        %s438 = scalar_select %p437, %s27, 1
        %s439 = smul.addr %s438, 8
        %s440 = smul.addr %s439, 4
        %s441 = scalar_lea.vmem %s3, %s440
      $region32: #{mixsegnet_forward.4} parent=15 // pred_fallthru
        _
      // Predicated region
      $region33: #{mixsegnet_forward.4} parent=15 // pred_check
        %p442 = pneg %p155
      $region34: #{mixsegnet_forward.4} parent=15 // pred_check_branch
        %444 = sbr.rel (%p442) target = $region36
      $region35: #{mixsegnet_forward.4} parent=15 // pred_region
        %p445 = scmp.lt.s32.totalorder %s27, 1
        %s446 = scalar_select %p445, %s27, 1
        %s447 = smul.addr %s446, 8
        %s448 = smul.addr %s447, 8
        %s449 = scalar_lea.vmem %s4, %s448
      $region36: #{mixsegnet_forward.4} parent=15 // pred_fallthru
        _
      // Predicated region
      $region37: #{mixsegnet_forward.4} parent=15 // pred_check
        %p450 = pneg %p181
      $region38: #{mixsegnet_forward.4} parent=15 // pred_check_branch
        %452 = sbr.rel (%p450) target = $region40
      $region39: #{mixsegnet_forward.4} parent=15 // pred_region
        %p453 = scmp.lt.s32.totalorder %s27, 1
        %s454 = scalar_select %p453, %s27, 1
        %s455 = smul.addr %s454, 2
        %s456 = smul.addr %s455, 4
        %s457 = scalar_lea.vmem %s5, %s456
      $region40: #{mixsegnet_forward.4} parent=15 // pred_fallthru
        _
      // Predicated region
      $region41: #{mixsegnet_forward.4} parent=15 // pred_check
        %p458 = pneg %p207
      $region42: #{mixsegnet_forward.4} parent=15 // pred_check_branch
        %460 = sbr.rel (%p458) target = $region44
      $region43: #{mixsegnet_forward.4} parent=15 // pred_region
        %p461 = scmp.lt.s32.totalorder %s27, 1
        %s462 = scalar_select %p461, %s27, 1
        %s463 = smul.addr %s462, 2
        %s464 = smul.addr %s463, 8
        %s465 = scalar_lea.vmem %s6, %s464
      $region44: #{mixsegnet_forward.4} parent=15 // pred_fallthru
        _
      // Predicated region
      $region45: #{mixsegnet_forward.4} parent=15 // pred_check
        %p466 = pneg %p233
      $region46: #{mixsegnet_forward.4} parent=15 // pred_check_branch
        %468 = sbr.rel (%p466) target = $region48
      $region47: #{mixsegnet_forward.4} parent=15 // pred_region
        %p469 = scmp.lt.s32.totalorder %s27, 1
        %s470 = scalar_select %p469, %s27, 1
        %s471 = scalar_lea.vmem %s7, %s470
      $region48: #{mixsegnet_forward.4} parent=15 // pred_fallthru
        _
      // Predicated region
      $region49: #{mixsegnet_forward.4} parent=15 // pred_check
        %p472 = pneg %p259
      $region50: #{mixsegnet_forward.4} parent=15 // pred_check_branch
        %474 = sbr.rel (%p472) target = $region52
      $region51: #{mixsegnet_forward.4} parent=15 // pred_region
        %p475 = scmp.lt.s32.totalorder %s27, 1
        %s476 = scalar_select %p475, %s27, 1
        %s477 = scalar_lea.vmem %s8, %s476
      $region52: #{mixsegnet_forward.4} parent=15 // pred_fallthru
        _
      // Predicated region
      $region53: #{mixsegnet_forward.4} parent=15 // pred_check
        %p478 = pneg %p285
      $region54: #{mixsegnet_forward.4} parent=15 // pred_check_branch
        %480 = sbr.rel (%p478) target = $region56
      $region55: #{mixsegnet_forward.4} parent=15 // pred_region
        %p481 = scmp.lt.s32.totalorder %s27, 1
        %s482 = scalar_select %p481, %s27, 1
        %s483 = smul.addr %s482, 64
        %s484 = smul.addr %s483, 4
        %s485 = scalar_lea.vmem %s9, %s484
      $region56: #{mixsegnet_forward.4} parent=15 // pred_fallthru
        _
      // Predicated region
      $region57: #{mixsegnet_forward.4} parent=15 // pred_check
        %p486 = pneg %p311
      $region58: #{mixsegnet_forward.4} parent=15 // pred_check_branch
        %488 = sbr.rel (%p486) target = $region60
      $region59: #{mixsegnet_forward.4} parent=15 // pred_region
        %p489 = scmp.lt.s32.totalorder %s27, 1
        %s490 = scalar_select %p489, %s27, 1
        %s491 = smul.addr %s490, 4
        %s492 = scalar_lea.vmem %s10, %s491
      $region60: #{mixsegnet_forward.4} parent=15 // pred_fallthru
        _
      // Predicated region
      $region61: #{mixsegnet_forward.4} parent=15 // pred_check
        %p493 = pneg %p337
      $region62: #{mixsegnet_forward.4} parent=15 // pred_check_branch
        %495 = sbr.rel (%p493) target = $region64
      $region63: #{mixsegnet_forward.4} parent=15 // pred_region
        %p496 = scmp.lt.s32.totalorder %s27, 1
        %s497 = scalar_select %p496, %s27, 1
        %s498 = smul.addr %s497, 64
        %s499 = smul.addr %s498, 4
        %s500 = scalar_lea.vmem %s11, %s499
      $region64: #{mixsegnet_forward.4} parent=15 // pred_fallthru
        _
      // Predicated region
      $region65: #{mixsegnet_forward.4} parent=15 // pred_check
        %p501 = pneg %p363
      $region66: #{mixsegnet_forward.4} parent=15 // pred_check_branch
        %503 = sbr.rel (%p501) target = $region68
      $region67: #{mixsegnet_forward.4} parent=15 // pred_region
        %p504 = scmp.lt.s32.totalorder %s27, 1
        %s505 = scalar_select %p504, %s27, 1
        %s506 = scalar_lea.vmem %s12, %s505
      $region68: #{mixsegnet_forward.4} parent=15 // pred_fallthru
        _
    $region16: #{mixsegnet_forward.4} parent=5 // pred_fallthru
      _
    %p507 = scmp.le.s32.totalorder 1, %s19
    %p508 = scmp.lt.s32.totalorder %s19, 5
    %p509 = pnand %p507, %p508
    %p510 = pneg %p509
    // Predicated region
    $region69: #{mixsegnet_forward.4} parent=5 // pred_check
      _
    $region70: #{mixsegnet_forward.4} parent=5 // pred_check_branch
      %512 = sbr.rel (%p509) target = $region72
    $region71: #{mixsegnet_forward.4} parent=5 // pred_region
      %s513 = ssub.s32 %s19, 1
      %p514 = scmp.lt.s32.totalorder %s28, 1
      %s515 = scalar_select %p514, %s28, 1
      %s516 = smul.addr %s515, 2
      %s517 = smul.addr %s516, 8
      %s518 = scalar_lea.vmem %s0, %s517
      %p519 = pneg %p57
      %p520 = pneg %p54
      %p521 = scmp.lt.s32.totalorder %s29, 1
      %s522 = scalar_select %p521, %s29, 1
      %s523 = scalar_lea.vmem %s1, %s522
      %p524 = pneg %p83
      %p525 = pneg %p80
      %p526 = scmp.lt.s32.totalorder %s29, 1
      %s527 = scalar_select %p526, %s29, 1
      %s528 = scalar_lea.vmem %s2, %s527
      %p529 = pneg %p109
      %p530 = pneg %p106
      %p531 = scmp.lt.s32.totalorder %s29, 1
      %s532 = scalar_select %p531, %s29, 1
      %s533 = smul.addr %s532, 8
      %s534 = smul.addr %s533, 4
      %s535 = scalar_lea.vmem %s3, %s534
      %p536 = pneg %p135
      %p537 = pneg %p132
      %p538 = scmp.lt.s32.totalorder %s29, 1
      %s539 = scalar_select %p538, %s29, 1
      %s540 = smul.addr %s539, 8
      %s541 = smul.addr %s540, 8
      %s542 = scalar_lea.vmem %s4, %s541
      %p543 = pneg %p161
      %p544 = pneg %p158
      %p545 = scmp.lt.s32.totalorder %s29, 1
      %s546 = scalar_select %p545, %s29, 1
      %s547 = smul.addr %s546, 2
      %s548 = smul.addr %s547, 4
      %s549 = scalar_lea.vmem %s5, %s548
      %p550 = pneg %p187
      %p551 = pneg %p184
      %p552 = scmp.lt.s32.totalorder %s29, 1
      %s553 = scalar_select %p552, %s29, 1
      %s554 = smul.addr %s553, 2
      %s555 = smul.addr %s554, 8
      %s556 = scalar_lea.vmem %s6, %s555
      %p557 = pneg %p213
      %p558 = pneg %p210
      %p559 = scmp.lt.s32.totalorder %s29, 1
      %s560 = scalar_select %p559, %s29, 1
      %s561 = scalar_lea.vmem %s7, %s560
      %p562 = pneg %p239
      %p563 = pneg %p236
      %p564 = scmp.lt.s32.totalorder %s29, 1
      %s565 = scalar_select %p564, %s29, 1
      %s566 = scalar_lea.vmem %s8, %s565
      %p567 = pneg %p265
      %p568 = pneg %p262
      %p569 = scmp.lt.s32.totalorder %s29, 1
      %s570 = scalar_select %p569, %s29, 1
      %s571 = smul.addr %s570, 64
      %s572 = smul.addr %s571, 4
      %s573 = scalar_lea.vmem %s9, %s572
      %p574 = pneg %p291
      %p575 = pneg %p288
      %p576 = scmp.lt.s32.totalorder %s29, 1
      %s577 = scalar_select %p576, %s29, 1
      %s578 = smul.addr %s577, 4
      %s579 = scalar_lea.vmem %s10, %s578
      %p580 = pneg %p317
      %p581 = pneg %p314
      %p582 = scmp.lt.s32.totalorder %s29, 1
      %s583 = scalar_select %p582, %s29, 1
      %s584 = smul.addr %s583, 64
      %s585 = smul.addr %s584, 4
      %s586 = scalar_lea.vmem %s11, %s585
      %p587 = pneg %p343
      %p588 = pneg %p340
      %p589 = scmp.lt.s32.totalorder %s29, 1
      %s590 = scalar_select %p589, %s29, 1
      %s591 = scalar_lea.vmem %s12, %s590
      %p592 = pneg %p369
      %p593 = pneg %p366
      %p594 = pneg %p395
      %p595 = pneg %p392
      %p596 = scmp.lt.s32.totalorder %s28, 1
      %s597 = scalar_select %p596, %s28, 1
      %s598 = smul.addr %s597, 2
      %s599 = smul.addr %s598, 8
      %s600 = scalar_lea.vmem %s13, %s599
      %p601 = scmp.lt.s32.totalorder %s28, 1
      %s602 = scalar_select %p601, %s28, 1
      %s603 = smul.addr %s602, 2
      %s604 = smul.addr %s603, 8
      %s605 = scalar_lea.vmem %s0, %s604
      %p606 = scmp.lt.s32.totalorder %s29, 1
      %s607 = scalar_select %p606, %s29, 1
      %s608 = scalar_lea.vmem %s1, %s607
      %p609 = scmp.lt.s32.totalorder %s29, 1
      %s610 = scalar_select %p609, %s29, 1
      %s611 = scalar_lea.vmem %s2, %s610
      %p612 = scmp.lt.s32.totalorder %s29, 1
      %s613 = scalar_select %p612, %s29, 1
      %s614 = smul.addr %s613, 8
      %s615 = smul.addr %s614, 4
      %s616 = scalar_lea.vmem %s3, %s615
      %p617 = scmp.lt.s32.totalorder %s29, 1
      %s618 = scalar_select %p617, %s29, 1
      %s619 = smul.addr %s618, 8
      %s620 = smul.addr %s619, 8
      %s621 = scalar_lea.vmem %s4, %s620
      %p622 = scmp.lt.s32.totalorder %s29, 1
      %s623 = scalar_select %p622, %s29, 1
      %s624 = smul.addr %s623, 2
      %s625 = smul.addr %s624, 4
      %s626 = scalar_lea.vmem %s5, %s625
      %p627 = scmp.lt.s32.totalorder %s29, 1
      %s628 = scalar_select %p627, %s29, 1
      %s629 = smul.addr %s628, 2
      %s630 = smul.addr %s629, 8
      %s631 = scalar_lea.vmem %s6, %s630
      %p632 = scmp.lt.s32.totalorder %s29, 1
      %s633 = scalar_select %p632, %s29, 1
      %s634 = scalar_lea.vmem %s7, %s633
      %p635 = scmp.lt.s32.totalorder %s29, 1
      %s636 = scalar_select %p635, %s29, 1
      %s637 = scalar_lea.vmem %s8, %s636
      %p638 = scmp.lt.s32.totalorder %s29, 1
      %s639 = scalar_select %p638, %s29, 1
      %s640 = smul.addr %s639, 64
      %s641 = smul.addr %s640, 4
      %s642 = scalar_lea.vmem %s9, %s641
      %p643 = scmp.lt.s32.totalorder %s29, 1
      %s644 = scalar_select %p643, %s29, 1
      %s645 = smul.addr %s644, 4
      %s646 = scalar_lea.vmem %s10, %s645
      %p647 = scmp.lt.s32.totalorder %s29, 1
      %s648 = scalar_select %p647, %s29, 1
      %s649 = smul.addr %s648, 64
      %s650 = smul.addr %s649, 4
      %s651 = scalar_lea.vmem %s11, %s650
      %p652 = scmp.lt.s32.totalorder %s29, 1
      %s653 = scalar_select %p652, %s29, 1
      %s654 = scalar_lea.vmem %s12, %s653
      %p655 = scmp.lt.s32.totalorder %s28, 1
      %s656 = scalar_select %p655, %s28, 1
      %s657 = smul.addr %s656, 2
      %s658 = smul.addr %s657, 8
      %s659 = scalar_lea.vmem %s13, %s658
      %p661 = scmp.eq.s32.totalorder %s29, 0
      // Predicated region
      $region73: #{mixsegnet_forward.4} parent=71 // pred_check
        %p662 = pneg %p661
      $region74: #{mixsegnet_forward.4} parent=71 // pred_check_branch
        %664 = sbr.rel (%p662) target = $region76
      $region75: #{mixsegnet_forward.4} parent=71 // pred_region
        %v665 = vld [vmem:[%s605] sm:$0xff]
        %v666 = vld [vmem:[%s605 + $0x8] sm:$0xff]
        %667 = vst [vmem:[%s659] sm:$0xff] %v665
        %668 = vst [vmem:[%s659 + $0x8] sm:$0xff] %v666
      $region76: #{mixsegnet_forward.4} parent=71 // pred_fallthru
        _
      %v669 = vld [vmem:[%s659] sm:$0xff]
      %v670 = vld [vmem:[%s659 + $0x8] sm:$0xff]
      %v671 = vld [vmem:[%s608] sm:$0x1]
      %v672 = vld [vmem:[%s611] sm:$0x1]
      %673 = vadd.xlane.f32.xlu0 %v669
      %v674 = vpop.xlane.xlu0 %673
      %675 = vadd.xlane.f32.xlu0 %v670
      %v676 = vpop.xlane.xlu0 %675
      %v677 = vrcp.pop 128.0
      %v678 = vmul.f32 %v674, %v677
      %v679 = vmul.f32 %v676, %v677
      %v680 = vsub.f32 %v669, %v678
      %v681 = vsub.f32 %v670, %v679
      %v682 = vmul.f32 %v680, %v680
      %v683 = vmul.f32 %v681, %v681
      %684 = vadd.xlane.f32.xlu0 %v682
      %v685 = vpop.xlane.xlu0 %684
      %686 = vadd.xlane.f32.xlu0 %v683
      %v687 = vpop.xlane.xlu0 %686
      %v688 = vmul.f32 %v685, %v677
      %v689 = vmul.f32 %v687, %v677
      %v690 = vadd.f32 %v688, 1e-05
      %v691 = vadd.f32 %v689, 1e-05
      %v692 = vrsqrt.pop %v690
      %v693 = vrsqrt.pop %v691
      %v694 = vmul.f32 %v680, %v692
      %v695 = vmul.f32 %v681, %v693
      %v697 = vlaneseq
      %v698 = vshrl.u32 %v697, 7
      %v699 = vsub.s32 0, %v698
      %v700 = vrot.slane %v671, %v699
      %v702 = vmul.f32 %v694, %v700
      %v703 = vmul.f32 %v695, %v700
      %v705 = vlaneseq
      %v706 = vshrl.u32 %v705, 7
      %v707 = vsub.s32 0, %v706
      %v708 = vrot.slane %v672, %v707
      %v710 = vadd.f32 %v702, %v708
      %v711 = vadd.f32 %v703, %v708
      %v712 = vpack.c.bf16 %v711, %v710
      %v713 = vld [vmem:[%s616] sm:$0xf]
      %v714 = vld [vmem:[%s616 + $0x4] sm:$0xf]
      %v715 = vld [vmem:[%s616 + $0x8] sm:$0xf]
      %v716 = vld [vmem:[%s616 + $0xc] sm:$0xf]
      %v717 = vld [vmem:[%s616 + $0x10] sm:$0xf]
      %v718 = vld [vmem:[%s616 + $0x14] sm:$0xf]
      %v719 = vld [vmem:[%s616 + $0x18] sm:$0xf]
      %v720 = vld [vmem:[%s616 + $0x1c] sm:$0xf]
      %v721 = vld [vmem:[%s621] sm:$0xff]
      %v722 = vld [vmem:[%s621 + $0x8] sm:$0xff]
      %v723 = vld [vmem:[%s621 + $0x10] sm:$0xff]
      %v724 = vld [vmem:[%s621 + $0x18] sm:$0xff]
      %v725 = vld [vmem:[%s621 + $0x20] sm:$0xff]
      %v726 = vld [vmem:[%s621 + $0x28] sm:$0xff]
      %v727 = vld [vmem:[%s621 + $0x30] sm:$0xff]
      %v728 = vld [vmem:[%s621 + $0x38] sm:$0xff]
      %730 = vset.pattern.permute.xlu0 0
      %731 = vperm.xlu0 %730, %v721
      %v732 = vpop.permute.xlu0 %731
      %735 = vset.pattern.permute.xlu0 0
      %736 = vperm.xlu0 %735, %v722
      %v737 = vpop.permute.xlu0 %736
      %740 = vset.pattern.permute.xlu0 0
      %741 = vperm.xlu0 %740, %v723
      %v742 = vpop.permute.xlu0 %741
      %745 = vset.pattern.permute.xlu0 0
      %746 = vperm.xlu0 %745, %v724
      %v747 = vpop.permute.xlu0 %746
      %750 = vset.pattern.permute.xlu0 0
      %751 = vperm.xlu0 %750, %v725
      %v752 = vpop.permute.xlu0 %751
      %755 = vset.pattern.permute.xlu0 0
      %756 = vperm.xlu0 %755, %v726
      %v757 = vpop.permute.xlu0 %756
      %760 = vset.pattern.permute.xlu0 0
      %761 = vperm.xlu0 %760, %v727
      %v762 = vpop.permute.xlu0 %761
      %765 = vset.pattern.permute.xlu0 0
      %766 = vperm.xlu0 %765, %v728
      %v767 = vpop.permute.xlu0 %766
      %v777 = vunpack.c.l.b16 %v713
      %v778 = vunpack.c.l.b16 %v714
      %v779 = vunpack.c.l.b16 %v715
      %v780 = vunpack.c.l.b16 %v716
      %v781 = vunpack.c.l.b16 %v717
      %v782 = vunpack.c.l.b16 %v718
      %v783 = vunpack.c.l.b16 %v719
      %v784 = vunpack.c.l.b16 %v720
      %v785 = vpack.c.b16 %v778, %v777
      %v786 = vpack.c.b16 %v780, %v779
      %v787 = vpack.c.b16 %v782, %v781
      %v788 = vpack.c.b16 %v784, %v783
      %vm789 = vcmask 130048
      %v791 = vsel %vm789, %v785, 0
      %v794 = vsel %vm789, %v786, 0
      %v797 = vsel %vm789, %v787, 0
      %v800 = vsel %vm789, %v788, 0
      %802 = vmatprep.subr.bf16.mxu0 0
      %803 = vmatpush1.bf16.msra.mxu0 %v712
      %804 = vmatprep.subr.bf16.mxu0 0
      %805 = vmatpush1.bf16.msra.mxu0 0
      %806 = vmatprep.subr.bf16.mxu0 0
      %807 = vmatpush1.bf16.msra.mxu0 0
      %808 = vmatprep.subr.bf16.mxu0 0
      %809 = vmatpush1.bf16.msra.mxu0 0
      %810 = vmatprep.subr.bf16.mxu0 0
      %811 = vmatpush1.bf16.msra.mxu0 0
      %812 = vmatprep.subr.bf16.mxu0 0
      %813 = vmatpush1.bf16.msra.mxu0 0
      %814 = vmatprep.subr.bf16.mxu0 0
      %815 = vmatpush1.bf16.msra.mxu0 0
      %816 = vmatprep.subr.bf16.mxu0 0
      %817 = vmatpush1.bf16.msra.mxu0 0
      %818 = vmatprep.subr.bf16.mxu0 0
      %819 = vmatpush1.bf16.msra.mxu0 0
      %820 = vmatprep.subr.bf16.mxu0 0
      %821 = vmatpush1.bf16.msra.mxu0 0
      %822 = vmatprep.subr.bf16.mxu0 0
      %823 = vmatpush1.bf16.msra.mxu0 0
      %824 = vmatprep.subr.bf16.mxu0 0
      %825 = vmatpush1.bf16.msra.mxu0 0
      %826 = vmatprep.subr.bf16.mxu0 0
      %827 = vmatpush1.bf16.msra.mxu0 0
      %828 = vmatprep.subr.bf16.mxu0 0
      %829 = vmatpush1.bf16.msra.mxu0 0
      %830 = vmatprep.subr.bf16.mxu0 0
      %831 = vmatpush1.bf16.msra.mxu0 0
      %832 = vmatprep.subr.bf16.mxu0 0
      %833 = vmatpush1.bf16.msra.mxu0 0
      %834 = vmatprep.mubr.bf16.mxu0 0
      %835 = vmatmul.mubr.bf16.gmra.mrb[0].mxu0 %v791
      %v836 = vpop.f32.mrb[0].mxu0
      %v837 = vadd.f32 %v732, %v836
      %v838 = vpop.f32.mrb[0].mxu0
      %v839 = vpop.f32.mrb[0].mxu0
      %v840 = vadd.f32 %v737, %v839
      %v841 = vpop.f32.mrb[0].mxu0
      %842 = vmatprep.mubr.bf16.mxu0 0
      %843 = vmatmul.mubr.bf16.gmra.mrb[0].mxu0 %v794
      %v844 = vpop.f32.mrb[0].mxu0
      %v845 = vadd.f32 %v742, %v844
      %v846 = vpop.f32.mrb[0].mxu0
      %v847 = vpop.f32.mrb[0].mxu0
      %v848 = vadd.f32 %v747, %v847
      %v849 = vpop.f32.mrb[0].mxu0
      %850 = vmatprep.mubr.bf16.mxu0 0
      %851 = vmatmul.mubr.bf16.gmra.mrb[0].mxu0 %v797
      %v852 = vpop.f32.mrb[0].mxu0
      %v853 = vadd.f32 %v752, %v852
      %v854 = vpop.f32.mrb[0].mxu0
      %v855 = vpop.f32.mrb[0].mxu0
      %v856 = vadd.f32 %v757, %v855
      %v857 = vpop.f32.mrb[0].mxu0
      %858 = vmatprep.mubr.bf16.mxu0 0
      %859 = vmatmul.mubr.bf16.gmra.mrb[0].mxu0 %v800
      %v860 = vpop.f32.mrb[0].mxu0
      %v861 = vadd.f32 %v762, %v860
      %v862 = vpop.f32.mrb[0].mxu0
      %v863 = vpop.f32.mrb[0].mxu0
      %v864 = vadd.f32 %v767, %v863
      %v865 = vpop.f32.mrb[0].mxu0
      %866 = vdwg.mxu0
      %v867 = vmul.f32 %v837, 0.5
      %v868 = vmul.f32 %v840, 0.5
      %v869 = vmul.f32 %v845, 0.5
      %v870 = vmul.f32 %v848, 0.5
      %v871 = vmul.f32 %v853, 0.5
      %v872 = vmul.f32 %v856, 0.5
      %v873 = vmul.f32 %v861, 0.5
      %v874 = vmul.f32 %v864, 0.5
      %v875 = vmul.f32 %v837, 0.70710677
      %v876 = vmul.f32 %v840, 0.70710677
      %v877 = vmul.f32 %v845, 0.70710677
      %v878 = vmul.f32 %v848, 0.70710677
      %v879 = vmul.f32 %v853, 0.70710677
      %v880 = vmul.f32 %v856, 0.70710677
      %v881 = vmul.f32 %v861, 0.70710677
      %v882 = vmul.f32 %v864, 0.70710677
      %v883 = verf.f32.pop %v875
      %v884 = verf.f32.pop %v876
      %v885 = verf.f32.pop %v877
      %v886 = verf.f32.pop %v878
      %v887 = verf.f32.pop %v879
      %v888 = verf.f32.pop %v880
      %v889 = verf.f32.pop %v881
      %v890 = verf.f32.pop %v882
      %v891 = vadd.f32 %v883, 1.0
      %v892 = vadd.f32 %v884, 1.0
      %v893 = vadd.f32 %v885, 1.0
      %v894 = vadd.f32 %v886, 1.0
      %v895 = vadd.f32 %v887, 1.0
      %v896 = vadd.f32 %v888, 1.0
      %v897 = vadd.f32 %v889, 1.0
      %v898 = vadd.f32 %v890, 1.0
      %v899 = vmul.f32 %v867, %v891
      %v900 = vmul.f32 %v868, %v892
      %v901 = vmul.f32 %v869, %v893
      %v902 = vmul.f32 %v870, %v894
      %v903 = vmul.f32 %v871, %v895
      %v904 = vmul.f32 %v872, %v896
      %v905 = vmul.f32 %v873, %v897
      %v906 = vmul.f32 %v874, %v898
      %v907 = vpack.c.bf16 %v900, %v899
      %v908 = vpack.c.bf16 %v902, %v901
      %v909 = vpack.c.bf16 %v904, %v903
      %v910 = vpack.c.bf16 %v906, %v905
      %v911 = vld [vmem:[%s626] sm:$0xf]
      %v912 = vld [vmem:[%s626 + $0x4] sm:$0xf]
      %v915 = vunpack.c.l.b16 %v911
      %v916 = vunpack.c.l.b16 %v912
      %v917 = vpack.c.b16 %v916, %v915
      %vm918 = vcmask 523264
      %v920 = vsel %vm918, %v917, 0
      %922 = vmatprep.subr.bf16.mxu0 0
      %923 = vmatpush1.bf16.msra.mxu0 %v907
      %924 = vmatprep.subr.bf16.mxu0 0
      %925 = vmatpush1.bf16.msra.mxu0 %v908
      %926 = vmatprep.subr.bf16.mxu0 0
      %927 = vmatpush1.bf16.msra.mxu0 %v909
      %928 = vmatprep.subr.bf16.mxu0 0
      %929 = vmatpush1.bf16.msra.mxu0 %v910
      %930 = vmatprep.subr.bf16.mxu0 0
      %931 = vmatpush1.bf16.msra.mxu0 0
      %932 = vmatprep.subr.bf16.mxu0 0
      %933 = vmatpush1.bf16.msra.mxu0 0
      %934 = vmatprep.subr.bf16.mxu0 0
      %935 = vmatpush1.bf16.msra.mxu0 0
      %936 = vmatprep.subr.bf16.mxu0 0
      %937 = vmatpush1.bf16.msra.mxu0 0
      %938 = vmatprep.subr.bf16.mxu0 0
      %939 = vmatpush1.bf16.msra.mxu0 0
      %940 = vmatprep.subr.bf16.mxu0 0
      %941 = vmatpush1.bf16.msra.mxu0 0
      %942 = vmatprep.subr.bf16.mxu0 0
      %943 = vmatpush1.bf16.msra.mxu0 0
      %944 = vmatprep.subr.bf16.mxu0 0
      %945 = vmatpush1.bf16.msra.mxu0 0
      %946 = vmatprep.subr.bf16.mxu0 0
      %947 = vmatpush1.bf16.msra.mxu0 0
      %948 = vmatprep.subr.bf16.mxu0 0
      %949 = vmatpush1.bf16.msra.mxu0 0
      %950 = vmatprep.subr.bf16.mxu0 0
      %951 = vmatpush1.bf16.msra.mxu0 0
      %952 = vmatprep.subr.bf16.mxu0 0
      %953 = vmatpush1.bf16.msra.mxu0 0
      %954 = vmatprep.mubr.bf16.mxu0 0
      %955 = vmatmul.mubr.bf16.gmra.mrb[0].mxu0 %v920
      %v956 = vpop.f32.mrb[0].mxu0
      %v957 = vadd.f32 0.0, %v956
      %v958 = vpop.f32.mrb[0].mxu0
      %v959 = vpop.f32.mrb[0].mxu0
      %v960 = vadd.f32 0.0, %v959
      %v961 = vpop.f32.mrb[0].mxu0
      %962 = vdwg.mxu0
      %v963 = vadd.f32 %v669, %v957
      %v964 = vadd.f32 %v670, %v960
      %v965 = vld [vmem:[%s631] sm:$0xff]
      %v966 = vld [vmem:[%s631 + $0x8] sm:$0xff]
      %968 = vset.pattern.permute.xlu0 0
      %969 = vperm.xlu0 %968, %v965
      %v970 = vpop.permute.xlu0 %969
      %973 = vset.pattern.permute.xlu0 0
      %974 = vperm.xlu0 %973, %v966
      %v975 = vpop.permute.xlu0 %974
      %v977 = vadd.f32 %v963, %v970
      %v978 = vadd.f32 %v964, %v975
      %v979 = vld [vmem:[%s634] sm:$0x1]
      %v980 = vld [vmem:[%s637] sm:$0x1]
      %981 = vadd.xlane.f32.xlu0 %v977
      %v982 = vpop.xlane.xlu0 %981
      %983 = vadd.xlane.f32.xlu0 %v978
      %v984 = vpop.xlane.xlu0 %983
      %v985 = vmul.f32 %v982, %v677
      %v986 = vmul.f32 %v984, %v677
      %v987 = vsub.f32 %v977, %v985
      %v988 = vsub.f32 %v978, %v986
      %v989 = vmul.f32 %v987, %v987
      %v990 = vmul.f32 %v988, %v988
      %991 = vadd.xlane.f32.xlu0 %v989
      %v992 = vpop.xlane.xlu0 %991
      %993 = vadd.xlane.f32.xlu0 %v990
      %v994 = vpop.xlane.xlu0 %993
      %v995 = vmul.f32 %v992, %v677
      %v996 = vmul.f32 %v994, %v677
      %v997 = vadd.f32 %v995, 1e-05
      %v998 = vadd.f32 %v996, 1e-05
      %v999 = vrsqrt.pop %v997
      %v1000 = vrsqrt.pop %v998
      %v1001 = vmul.f32 %v987, %v999
      %v1002 = vmul.f32 %v988, %v1000
      %v1004 = vlaneseq
      %v1005 = vshrl.u32 %v1004, 7
      %v1006 = vsub.s32 0, %v1005
      %v1007 = vrot.slane %v979, %v1006
      %v1009 = vmul.f32 %v1001, %v1007
      %v1010 = vmul.f32 %v1002, %v1007
      %v1012 = vlaneseq
      %v1013 = vshrl.u32 %v1012, 7
      %v1014 = vsub.s32 0, %v1013
      %v1015 = vrot.slane %v980, %v1014
      %v1017 = vadd.f32 %v1009, %v1015
      %v1018 = vadd.f32 %v1010, %v1015
      %v1019 = vpack.c.bf16 %v1018, %v1017
      %v1020 = vld [vmem:[%s642] sm:$0xff]
      %v1021 = vld [vmem:[%s642 + $0x8] sm:$0xff]
      %v1022 = vld [vmem:[%s642 + $0x10] sm:$0xff]
      %v1023 = vld [vmem:[%s642 + $0x18] sm:$0xff]
      %v1024 = vld [vmem:[%s642 + $0x20] sm:$0xff]
      %v1025 = vld [vmem:[%s642 + $0x28] sm:$0xff]
      %v1026 = vld [vmem:[%s642 + $0x30] sm:$0xff]
      %v1027 = vld [vmem:[%s642 + $0x38] sm:$0xff]
      %v1028 = vld [vmem:[%s642 + $0x40] sm:$0xff]
      %v1029 = vld [vmem:[%s642 + $0x48] sm:$0xff]
      %v1030 = vld [vmem:[%s642 + $0x50] sm:$0xff]
      %v1031 = vld [vmem:[%s642 + $0x58] sm:$0xff]
      %v1032 = vld [vmem:[%s642 + $0x60] sm:$0xff]
      %v1033 = vld [vmem:[%s642 + $0x68] sm:$0xff]
      %v1034 = vld [vmem:[%s642 + $0x70] sm:$0xff]
      %v1035 = vld [vmem:[%s642 + $0x78] sm:$0xff]
      %v1036 = vld [vmem:[%s642 + $0x80] sm:$0xff]
      %v1037 = vld [vmem:[%s642 + $0x88] sm:$0xff]
      %v1038 = vld [vmem:[%s642 + $0x90] sm:$0xff]
      %v1039 = vld [vmem:[%s642 + $0x98] sm:$0xff]
      %v1040 = vld [vmem:[%s642 + $0xa0] sm:$0xff]
      %v1041 = vld [vmem:[%s642 + $0xa8] sm:$0xff]
      %v1042 = vld [vmem:[%s642 + $0xb0] sm:$0xff]
      %v1043 = vld [vmem:[%s642 + $0xb8] sm:$0xff]
      %v1044 = vld [vmem:[%s642 + $0xc0] sm:$0xff]
      %v1045 = vld [vmem:[%s642 + $0xc8] sm:$0xff]
      %v1046 = vld [vmem:[%s642 + $0xd0] sm:$0xff]
      %v1047 = vld [vmem:[%s642 + $0xd8] sm:$0xff]
      %v1048 = vld [vmem:[%s642 + $0xe0] sm:$0xff]
      %v1049 = vld [vmem:[%s642 + $0xe8] sm:$0xff]
      %v1050 = vld [vmem:[%s642 + $0xf0] sm:$0xff]
      %v1051 = vld [vmem:[%s642 + $0xf8] sm:$0xff]
      %v1052 = vld [vmem:[%s646] sm:$0xf]
      %v1054 = vlaneseq
      %v1055 = vshrl.u32 %v1054, 7
      %v1056 = vsub.s32 0, %v1055
      %v1057 = vrot.slane %v1052, %v1056
      %v1058 = vlaneseq
      %v1059 = vshrl.u32 %v1058, 7
      %v1060 = vsub.s32 1, %v1059
      %v1061 = vrot.slane %v1052, %v1060
      %v1062 = vlaneseq
      %v1063 = vshrl.u32 %v1062, 7
      %v1064 = vsub.s32 2, %v1063
      %v1065 = vrot.slane %v1052, %v1064
      %v1066 = vlaneseq
      %v1067 = vshrl.u32 %v1066, 7
      %v1068 = vsub.s32 3, %v1067
      %v1069 = vrot.slane %v1052, %v1068
      %v1106 = vunpack.c.l.b16 %v1020
      %v1107 = vunpack.c.h.b16 %v1020
      %v1108 = vunpack.c.l.b16 %v1021
      %v1109 = vunpack.c.h.b16 %v1021
      %v1110 = vunpack.c.l.b16 %v1022
      %v1111 = vunpack.c.h.b16 %v1022
      %v1112 = vunpack.c.l.b16 %v1023
      %v1113 = vunpack.c.h.b16 %v1023
      %v1114 = vunpack.c.l.b16 %v1024
      %v1115 = vunpack.c.h.b16 %v1024
      %v1116 = vunpack.c.l.b16 %v1025
      %v1117 = vunpack.c.h.b16 %v1025
      %v1118 = vunpack.c.l.b16 %v1026
      %v1119 = vunpack.c.h.b16 %v1026
      %v1120 = vunpack.c.l.b16 %v1027
      %v1121 = vunpack.c.h.b16 %v1027
      %v1122 = vunpack.c.l.b16 %v1028
      %v1123 = vunpack.c.h.b16 %v1028
      %v1124 = vunpack.c.l.b16 %v1029
      %v1125 = vunpack.c.h.b16 %v1029
      %v1126 = vunpack.c.l.b16 %v1030
      %v1127 = vunpack.c.h.b16 %v1030
      %v1128 = vunpack.c.l.b16 %v1031
      %v1129 = vunpack.c.h.b16 %v1031
      %v1130 = vunpack.c.l.b16 %v1032
      %v1131 = vunpack.c.h.b16 %v1032
      %v1132 = vunpack.c.l.b16 %v1033
      %v1133 = vunpack.c.h.b16 %v1033
      %v1134 = vunpack.c.l.b16 %v1034
      %v1135 = vunpack.c.h.b16 %v1034
      %v1136 = vunpack.c.l.b16 %v1035
      %v1137 = vunpack.c.h.b16 %v1035
      %v1138 = vunpack.c.l.b16 %v1036
      %v1139 = vunpack.c.h.b16 %v1036
      %v1140 = vunpack.c.l.b16 %v1037
      %v1141 = vunpack.c.h.b16 %v1037
      %v1142 = vunpack.c.l.b16 %v1038
      %v1143 = vunpack.c.h.b16 %v1038
      %v1144 = vunpack.c.l.b16 %v1039
      %v1145 = vunpack.c.h.b16 %v1039
      %v1146 = vunpack.c.l.b16 %v1040
      %v1147 = vunpack.c.h.b16 %v1040
      %v1148 = vunpack.c.l.b16 %v1041
      %v1149 = vunpack.c.h.b16 %v1041
      %v1150 = vunpack.c.l.b16 %v1042
      %v1151 = vunpack.c.h.b16 %v1042
      %v1152 = vunpack.c.l.b16 %v1043
      %v1153 = vunpack.c.h.b16 %v1043
      %v1154 = vunpack.c.l.b16 %v1044
      %v1155 = vunpack.c.h.b16 %v1044
      %v1156 = vunpack.c.l.b16 %v1045
      %v1157 = vunpack.c.h.b16 %v1045
      %v1158 = vunpack.c.l.b16 %v1046
      %v1159 = vunpack.c.h.b16 %v1046
      %v1160 = vunpack.c.l.b16 %v1047
      %v1161 = vunpack.c.h.b16 %v1047
      %v1162 = vunpack.c.l.b16 %v1048
      %v1163 = vunpack.c.h.b16 %v1048
      %v1164 = vunpack.c.l.b16 %v1049
      %v1165 = vunpack.c.h.b16 %v1049
      %v1166 = vunpack.c.l.b16 %v1050
      %v1167 = vunpack.c.h.b16 %v1050
      %v1168 = vunpack.c.l.b16 %v1051
      %v1169 = vunpack.c.h.b16 %v1051
      %v1170 = vpack.c.b16 %v1110, %v1106
      %v1171 = vpack.c.b16 %v1111, %v1107
      %v1172 = vpack.c.b16 %v1112, %v1108
      %v1173 = vpack.c.b16 %v1113, %v1109
      %v1174 = vpack.c.b16 %v1118, %v1114
      %v1175 = vpack.c.b16 %v1119, %v1115
      %v1176 = vpack.c.b16 %v1120, %v1116
      %v1177 = vpack.c.b16 %v1121, %v1117
      %v1178 = vpack.c.b16 %v1126, %v1122
      %v1179 = vpack.c.b16 %v1127, %v1123
      %v1180 = vpack.c.b16 %v1128, %v1124
      %v1181 = vpack.c.b16 %v1129, %v1125
      %v1182 = vpack.c.b16 %v1134, %v1130
      %v1183 = vpack.c.b16 %v1135, %v1131
      %v1184 = vpack.c.b16 %v1136, %v1132
      %v1185 = vpack.c.b16 %v1137, %v1133
      %v1186 = vpack.c.b16 %v1142, %v1138
      %v1187 = vpack.c.b16 %v1143, %v1139
      %v1188 = vpack.c.b16 %v1144, %v1140
      %v1189 = vpack.c.b16 %v1145, %v1141
      %v1190 = vpack.c.b16 %v1150, %v1146
      %v1191 = vpack.c.b16 %v1151, %v1147
      %v1192 = vpack.c.b16 %v1152, %v1148
      %v1193 = vpack.c.b16 %v1153, %v1149
      %v1194 = vpack.c.b16 %v1158, %v1154
      %v1195 = vpack.c.b16 %v1159, %v1155
      %v1196 = vpack.c.b16 %v1160, %v1156
      %v1197 = vpack.c.b16 %v1161, %v1157
      %v1198 = vpack.c.b16 %v1166, %v1162
      %v1199 = vpack.c.b16 %v1167, %v1163
      %v1200 = vpack.c.b16 %v1168, %v1164
      %v1201 = vpack.c.b16 %v1169, %v1165
      %1234 = vmatprep.subr.bf16.mxu0 %v1171
      %1235 = vmatpush1.bf16.msra.mxu0 %v1170
      %1236 = vmatprep.subr.bf16.mxu0 %v1175
      %1237 = vmatpush1.bf16.msra.mxu0 %v1174
      %1238 = vmatprep.subr.bf16.mxu0 %v1179
      %1239 = vmatpush1.bf16.msra.mxu0 %v1178
      %1240 = vmatprep.subr.bf16.mxu0 %v1183
      %1241 = vmatpush1.bf16.msra.mxu0 %v1182
      %1242 = vmatprep.subr.bf16.mxu0 %v1187
      %1243 = vmatpush1.bf16.msra.mxu0 %v1186
      %1244 = vmatprep.subr.bf16.mxu0 %v1191
      %1245 = vmatpush1.bf16.msra.mxu0 %v1190
      %1246 = vmatprep.subr.bf16.mxu0 %v1195
      %1247 = vmatpush1.bf16.msra.mxu0 %v1194
      %1248 = vmatprep.subr.bf16.mxu0 %v1199
      %1249 = vmatpush1.bf16.msra.mxu0 %v1198
      %1250 = vmatprep.subr.bf16.mxu0 0
      %1251 = vmatpush1.bf16.msra.mxu0 0
      %1252 = vmatprep.subr.bf16.mxu0 0
      %1253 = vmatpush1.bf16.msra.mxu0 0
      %1254 = vmatprep.subr.bf16.mxu0 0
      %1255 = vmatpush1.bf16.msra.mxu0 0
      %1256 = vmatprep.subr.bf16.mxu0 0
      %1257 = vmatpush1.bf16.msra.mxu0 0
      %1258 = vmatprep.subr.bf16.mxu0 0
      %1259 = vmatpush1.bf16.msra.mxu0 0
      %1260 = vmatprep.subr.bf16.mxu0 0
      %1261 = vmatpush1.bf16.msra.mxu0 0
      %1262 = vmatprep.subr.bf16.mxu0 0
      %1263 = vmatpush1.bf16.msra.mxu0 0
      %1264 = vmatprep.subr.bf16.mxu0 0
      %1265 = vmatpush1.bf16.msra.mxu0 0
      %1266 = vmatprep.mubr.bf16.mxu0 0
      %1267 = vmatmul.mubr.bf16.gmra.mrb[0].mxu0 %v1019
      %v1268 = vpop.f32.mrb[0].mxu0
      %v1269 = vadd.f32 %v1057, %v1268
      %v1270 = vpop.f32.mrb[0].mxu0
      %v1271 = vadd.f32 %v1061, %v1270
      %v1272 = vpop.f32.mrb[0].mxu0
      %v1273 = vadd.f32 %v1057, %v1272
      %v1274 = vpop.f32.mrb[0].mxu0
      %v1275 = vadd.f32 %v1061, %v1274
      %1276 = vdwg.mxu0
      %1277 = vmatprep.subr.bf16.mxu0 %v1173
      %1278 = vmatpush1.bf16.msra.mxu0 %v1172
      %1279 = vmatprep.subr.bf16.mxu0 %v1177
      %1280 = vmatpush1.bf16.msra.mxu0 %v1176
      %1281 = vmatprep.subr.bf16.mxu0 %v1181
      %1282 = vmatpush1.bf16.msra.mxu0 %v1180
      %1283 = vmatprep.subr.bf16.mxu0 %v1185
      %1284 = vmatpush1.bf16.msra.mxu0 %v1184
      %1285 = vmatprep.subr.bf16.mxu0 %v1189
      %1286 = vmatpush1.bf16.msra.mxu0 %v1188
      %1287 = vmatprep.subr.bf16.mxu0 %v1193
      %1288 = vmatpush1.bf16.msra.mxu0 %v1192
      %1289 = vmatprep.subr.bf16.mxu0 %v1197
      %1290 = vmatpush1.bf16.msra.mxu0 %v1196
      %1291 = vmatprep.subr.bf16.mxu0 %v1201
      %1292 = vmatpush1.bf16.msra.mxu0 %v1200
      %1293 = vmatprep.subr.bf16.mxu0 0
      %1294 = vmatpush1.bf16.msra.mxu0 0
      %1295 = vmatprep.subr.bf16.mxu0 0
      %1296 = vmatpush1.bf16.msra.mxu0 0
      %1297 = vmatprep.subr.bf16.mxu0 0
      %1298 = vmatpush1.bf16.msra.mxu0 0
      %1299 = vmatprep.subr.bf16.mxu0 0
      %1300 = vmatpush1.bf16.msra.mxu0 0
      %1301 = vmatprep.subr.bf16.mxu0 0
      %1302 = vmatpush1.bf16.msra.mxu0 0
      %1303 = vmatprep.subr.bf16.mxu0 0
      %1304 = vmatpush1.bf16.msra.mxu0 0
      %1305 = vmatprep.subr.bf16.mxu0 0
      %1306 = vmatpush1.bf16.msra.mxu0 0
      %1307 = vmatprep.subr.bf16.mxu0 0
      %1308 = vmatpush1.bf16.msra.mxu0 0
      %1309 = vmatprep.mubr.bf16.mxu0 0
      %1310 = vmatmul.mubr.bf16.gmra.mrb[0].mxu0 %v1019
      %v1311 = vpop.f32.mrb[0].mxu0
      %v1312 = vadd.f32 %v1065, %v1311
      %v1313 = vpop.f32.mrb[0].mxu0
      %v1314 = vadd.f32 %v1069, %v1313
      %v1315 = vpop.f32.mrb[0].mxu0
      %v1316 = vadd.f32 %v1065, %v1315
      %v1317 = vpop.f32.mrb[0].mxu0
      %v1318 = vadd.f32 %v1069, %v1317
      %1319 = vdwg.mxu0
      %v1320 = vmul.f32 %v1269, 0.5
      %v1321 = vmul.f32 %v1271, 0.5
      %v1322 = vmul.f32 %v1312, 0.5
      %v1323 = vmul.f32 %v1314, 0.5
      %v1324 = vmul.f32 %v1273, 0.5
      %v1325 = vmul.f32 %v1275, 0.5
      %v1326 = vmul.f32 %v1316, 0.5
      %v1327 = vmul.f32 %v1318, 0.5
      %v1328 = vmul.f32 %v1269, 0.70710677
      %v1329 = vmul.f32 %v1271, 0.70710677
      %v1330 = vmul.f32 %v1312, 0.70710677
      %v1331 = vmul.f32 %v1314, 0.70710677
      %v1332 = vmul.f32 %v1273, 0.70710677
      %v1333 = vmul.f32 %v1275, 0.70710677
      %v1334 = vmul.f32 %v1316, 0.70710677
      %v1335 = vmul.f32 %v1318, 0.70710677
      %v1336 = verf.f32.pop %v1328
      %v1337 = verf.f32.pop %v1329
      %v1338 = verf.f32.pop %v1330
      %v1339 = verf.f32.pop %v1331
      %v1340 = verf.f32.pop %v1332
      %v1341 = verf.f32.pop %v1333
      %v1342 = verf.f32.pop %v1334
      %v1343 = verf.f32.pop %v1335
      %v1344 = vadd.f32 %v1336, 1.0
      %v1345 = vadd.f32 %v1337, 1.0
      %v1346 = vadd.f32 %v1338, 1.0
      %v1347 = vadd.f32 %v1339, 1.0
      %v1348 = vadd.f32 %v1340, 1.0
      %v1349 = vadd.f32 %v1341, 1.0
      %v1350 = vadd.f32 %v1342, 1.0
      %v1351 = vadd.f32 %v1343, 1.0
      %v1352 = vmul.f32 %v1320, %v1344
      %v1353 = vmul.f32 %v1321, %v1345
      %v1354 = vmul.f32 %v1322, %v1346
      %v1355 = vmul.f32 %v1323, %v1347
      %v1356 = vmul.f32 %v1324, %v1348
      %v1357 = vmul.f32 %v1325, %v1349
      %v1358 = vmul.f32 %v1326, %v1350
      %v1359 = vmul.f32 %v1327, %v1351
      %v1360 = vpack.c.bf16 %v1356, %v1352
      %v1361 = vpack.c.bf16 %v1357, %v1353
      %v1362 = vpack.c.bf16 %v1358, %v1354
      %v1363 = vpack.c.bf16 %v1359, %v1355
      %v1364 = vld [vmem:[%s651] sm:$0xf]
      %v1365 = vld [vmem:[%s651 + $0x4] sm:$0xf]
      %v1366 = vld [vmem:[%s651 + $0x8] sm:$0xf]
      %v1367 = vld [vmem:[%s651 + $0xc] sm:$0xf]
      %v1368 = vld [vmem:[%s651 + $0x10] sm:$0xf]
      %v1369 = vld [vmem:[%s651 + $0x14] sm:$0xf]
      %v1370 = vld [vmem:[%s651 + $0x18] sm:$0xf]
      %v1371 = vld [vmem:[%s651 + $0x1c] sm:$0xf]
      %v1372 = vld [vmem:[%s651 + $0x20] sm:$0xf]
      %v1373 = vld [vmem:[%s651 + $0x24] sm:$0xf]
      %v1374 = vld [vmem:[%s651 + $0x28] sm:$0xf]
      %v1375 = vld [vmem:[%s651 + $0x2c] sm:$0xf]
      %v1376 = vld [vmem:[%s651 + $0x30] sm:$0xf]
      %v1377 = vld [vmem:[%s651 + $0x34] sm:$0xf]
      %v1378 = vld [vmem:[%s651 + $0x38] sm:$0xf]
      %v1379 = vld [vmem:[%s651 + $0x3c] sm:$0xf]
      %v1380 = vld [vmem:[%s651 + $0x40] sm:$0xf]
      %v1381 = vld [vmem:[%s651 + $0x44] sm:$0xf]
      %v1382 = vld [vmem:[%s651 + $0x48] sm:$0xf]
      %v1383 = vld [vmem:[%s651 + $0x4c] sm:$0xf]
      %v1384 = vld [vmem:[%s651 + $0x50] sm:$0xf]
      %v1385 = vld [vmem:[%s651 + $0x54] sm:$0xf]
      %v1386 = vld [vmem:[%s651 + $0x58] sm:$0xf]
      %v1387 = vld [vmem:[%s651 + $0x5c] sm:$0xf]
      %v1388 = vld [vmem:[%s651 + $0x60] sm:$0xf]
      %v1389 = vld [vmem:[%s651 + $0x64] sm:$0xf]
      %v1390 = vld [vmem:[%s651 + $0x68] sm:$0xf]
      %v1391 = vld [vmem:[%s651 + $0x6c] sm:$0xf]
      %v1392 = vld [vmem:[%s651 + $0x70] sm:$0xf]
      %v1393 = vld [vmem:[%s651 + $0x74] sm:$0xf]
      %v1394 = vld [vmem:[%s651 + $0x78] sm:$0xf]
      %v1395 = vld [vmem:[%s651 + $0x7c] sm:$0xf]
      %v1396 = vld [vmem:[%s651 + $0x80] sm:$0xf]
      %v1397 = vld [vmem:[%s651 + $0x84] sm:$0xf]
      %v1398 = vld [vmem:[%s651 + $0x88] sm:$0xf]
      %v1399 = vld [vmem:[%s651 + $0x8c] sm:$0xf]
      %v1400 = vld [vmem:[%s651 + $0x90] sm:$0xf]
      %v1401 = vld [vmem:[%s651 + $0x94] sm:$0xf]
      %v1402 = vld [vmem:[%s651 + $0x98] sm:$0xf]
      %v1403 = vld [vmem:[%s651 + $0x9c] sm:$0xf]
      %v1404 = vld [vmem:[%s651 + $0xa0] sm:$0xf]
      %v1405 = vld [vmem:[%s651 + $0xa4] sm:$0xf]
      %v1406 = vld [vmem:[%s651 + $0xa8] sm:$0xf]
      %v1407 = vld [vmem:[%s651 + $0xac] sm:$0xf]
      %v1408 = vld [vmem:[%s651 + $0xb0] sm:$0xf]
      %v1409 = vld [vmem:[%s651 + $0xb4] sm:$0xf]
      %v1410 = vld [vmem:[%s651 + $0xb8] sm:$0xf]
      %v1411 = vld [vmem:[%s651 + $0xbc] sm:$0xf]
      %v1412 = vld [vmem:[%s651 + $0xc0] sm:$0xf]
      %v1413 = vld [vmem:[%s651 + $0xc4] sm:$0xf]
      %v1414 = vld [vmem:[%s651 + $0xc8] sm:$0xf]
      %v1415 = vld [vmem:[%s651 + $0xcc] sm:$0xf]
      %v1416 = vld [vmem:[%s651 + $0xd0] sm:$0xf]
      %v1417 = vld [vmem:[%s651 + $0xd4] sm:$0xf]
      %v1418 = vld [vmem:[%s651 + $0xd8] sm:$0xf]
      %v1419 = vld [vmem:[%s651 + $0xdc] sm:$0xf]
      %v1420 = vld [vmem:[%s651 + $0xe0] sm:$0xf]
      %v1421 = vld [vmem:[%s651 + $0xe4] sm:$0xf]
      %v1422 = vld [vmem:[%s651 + $0xe8] sm:$0xf]
      %v1423 = vld [vmem:[%s651 + $0xec] sm:$0xf]
      %v1424 = vld [vmem:[%s651 + $0xf0] sm:$0xf]
      %v1425 = vld [vmem:[%s651 + $0xf4] sm:$0xf]
      %v1426 = vld [vmem:[%s651 + $0xf8] sm:$0xf]
      %v1427 = vld [vmem:[%s651 + $0xfc] sm:$0xf]
      %v1492 = vunpack.c.l.b16 %v1364
      %v1493 = vunpack.c.l.b16 %v1365
      %v1494 = vunpack.c.l.b16 %v1366
      %v1495 = vunpack.c.l.b16 %v1367
      %v1496 = vunpack.c.l.b16 %v1368
      %v1497 = vunpack.c.l.b16 %v1369
      %v1498 = vunpack.c.l.b16 %v1370
      %v1499 = vunpack.c.l.b16 %v1371
      %v1500 = vunpack.c.l.b16 %v1372
      %v1501 = vunpack.c.l.b16 %v1373
      %v1502 = vunpack.c.l.b16 %v1374
      %v1503 = vunpack.c.l.b16 %v1375
      %v1504 = vunpack.c.l.b16 %v1376
      %v1505 = vunpack.c.l.b16 %v1377
      %v1506 = vunpack.c.l.b16 %v1378
      %v1507 = vunpack.c.l.b16 %v1379
      %v1508 = vunpack.c.l.b16 %v1380
      %v1509 = vunpack.c.l.b16 %v1381
      %v1510 = vunpack.c.l.b16 %v1382
      %v1511 = vunpack.c.l.b16 %v1383
      %v1512 = vunpack.c.l.b16 %v1384
      %v1513 = vunpack.c.l.b16 %v1385
      %v1514 = vunpack.c.l.b16 %v1386
      %v1515 = vunpack.c.l.b16 %v1387
      %v1516 = vunpack.c.l.b16 %v1388
      %v1517 = vunpack.c.l.b16 %v1389
      %v1518 = vunpack.c.l.b16 %v1390
      %v1519 = vunpack.c.l.b16 %v1391
      %v1520 = vunpack.c.l.b16 %v1392
      %v1521 = vunpack.c.l.b16 %v1393
      %v1522 = vunpack.c.l.b16 %v1394
      %v1523 = vunpack.c.l.b16 %v1395
      %v1524 = vunpack.c.l.b16 %v1396
      %v1525 = vunpack.c.l.b16 %v1397
      %v1526 = vunpack.c.l.b16 %v1398
      %v1527 = vunpack.c.l.b16 %v1399
      %v1528 = vunpack.c.l.b16 %v1400
      %v1529 = vunpack.c.l.b16 %v1401
      %v1530 = vunpack.c.l.b16 %v1402
      %v1531 = vunpack.c.l.b16 %v1403
      %v1532 = vunpack.c.l.b16 %v1404
      %v1533 = vunpack.c.l.b16 %v1405
      %v1534 = vunpack.c.l.b16 %v1406
      %v1535 = vunpack.c.l.b16 %v1407
      %v1536 = vunpack.c.l.b16 %v1408
      %v1537 = vunpack.c.l.b16 %v1409
      %v1538 = vunpack.c.l.b16 %v1410
      %v1539 = vunpack.c.l.b16 %v1411
      %v1540 = vunpack.c.l.b16 %v1412
      %v1541 = vunpack.c.l.b16 %v1413
      %v1542 = vunpack.c.l.b16 %v1414
      %v1543 = vunpack.c.l.b16 %v1415
      %v1544 = vunpack.c.l.b16 %v1416
      %v1545 = vunpack.c.l.b16 %v1417
      %v1546 = vunpack.c.l.b16 %v1418
      %v1547 = vunpack.c.l.b16 %v1419
      %v1548 = vunpack.c.l.b16 %v1420
      %v1549 = vunpack.c.l.b16 %v1421
      %v1550 = vunpack.c.l.b16 %v1422
      %v1551 = vunpack.c.l.b16 %v1423
      %v1552 = vunpack.c.l.b16 %v1424
      %v1553 = vunpack.c.l.b16 %v1425
      %v1554 = vunpack.c.l.b16 %v1426
      %v1555 = vunpack.c.l.b16 %v1427
      %v1556 = vpack.c.b16 %v1493, %v1492
      %v1557 = vpack.c.b16 %v1495, %v1494
      %v1558 = vpack.c.b16 %v1497, %v1496
      %v1559 = vpack.c.b16 %v1499, %v1498
      %v1560 = vpack.c.b16 %v1501, %v1500
      %v1561 = vpack.c.b16 %v1503, %v1502
      %v1562 = vpack.c.b16 %v1505, %v1504
      %v1563 = vpack.c.b16 %v1507, %v1506
      %v1564 = vpack.c.b16 %v1509, %v1508
      %v1565 = vpack.c.b16 %v1511, %v1510
      %v1566 = vpack.c.b16 %v1513, %v1512
      %v1567 = vpack.c.b16 %v1515, %v1514
      %v1568 = vpack.c.b16 %v1517, %v1516
      %v1569 = vpack.c.b16 %v1519, %v1518
      %v1570 = vpack.c.b16 %v1521, %v1520
      %v1571 = vpack.c.b16 %v1523, %v1522
      %v1572 = vpack.c.b16 %v1525, %v1524
      %v1573 = vpack.c.b16 %v1527, %v1526
      %v1574 = vpack.c.b16 %v1529, %v1528
      %v1575 = vpack.c.b16 %v1531, %v1530
      %v1576 = vpack.c.b16 %v1533, %v1532
      %v1577 = vpack.c.b16 %v1535, %v1534
      %v1578 = vpack.c.b16 %v1537, %v1536
      %v1579 = vpack.c.b16 %v1539, %v1538
      %v1580 = vpack.c.b16 %v1541, %v1540
      %v1581 = vpack.c.b16 %v1543, %v1542
      %v1582 = vpack.c.b16 %v1545, %v1544
      %v1583 = vpack.c.b16 %v1547, %v1546
      %v1584 = vpack.c.b16 %v1549, %v1548
      %v1585 = vpack.c.b16 %v1551, %v1550
      %v1586 = vpack.c.b16 %v1553, %v1552
      %v1587 = vpack.c.b16 %v1555, %v1554
      %1620 = vmatprep.subr.bf16.mxu0 0
      %1621 = vmatpush1.bf16.msra.mxu0 %v1556
      %1622 = vmatprep.subr.bf16.mxu0 0
      %1623 = vmatpush1.bf16.msra.mxu0 %v1557
      %1624 = vmatprep.subr.bf16.mxu0 0
      %1625 = vmatpush1.bf16.msra.mxu0 %v1558
      %1626 = vmatprep.subr.bf16.mxu0 0
      %1627 = vmatpush1.bf16.msra.mxu0 %v1559
      %1628 = vmatprep.subr.bf16.mxu0 0
      %1629 = vmatpush1.bf16.msra.mxu0 %v1560
      %1630 = vmatprep.subr.bf16.mxu0 0
      %1631 = vmatpush1.bf16.msra.mxu0 %v1561
      %1632 = vmatprep.subr.bf16.mxu0 0
      %1633 = vmatpush1.bf16.msra.mxu0 %v1562
      %1634 = vmatprep.subr.bf16.mxu0 0
      %1635 = vmatpush1.bf16.msra.mxu0 %v1563
      %1636 = vmatprep.subr.bf16.mxu0 0
      %1637 = vmatpush1.bf16.msra.mxu0 %v1564
      %1638 = vmatprep.subr.bf16.mxu0 0
      %1639 = vmatpush1.bf16.msra.mxu0 %v1565
      %1640 = vmatprep.subr.bf16.mxu0 0
      %1641 = vmatpush1.bf16.msra.mxu0 %v1566
      %1642 = vmatprep.subr.bf16.mxu0 0
      %1643 = vmatpush1.bf16.msra.mxu0 %v1567
      %1644 = vmatprep.subr.bf16.mxu0 0
      %1645 = vmatpush1.bf16.msra.mxu0 %v1568
      %1646 = vmatprep.subr.bf16.mxu0 0
      %1647 = vmatpush1.bf16.msra.mxu0 %v1569
      %1648 = vmatprep.subr.bf16.mxu0 0
      %1649 = vmatpush1.bf16.msra.mxu0 %v1570
      %1650 = vmatprep.subr.bf16.mxu0 0
      %1651 = vmatpush1.bf16.msra.mxu0 %v1571
      %1652 = vmatprep.mubr.bf16.mxu0 %v1361
      %1653 = vmatmul.mubr.bf16.gmra.mrb[0].mxu0 %v1360
      %v1654 = vpop.f32.mrb[0].mxu0
      %v1655 = vadd.f32 0.0, %v1654
      %v1656 = vpop.f32.mrb[0].mxu0
      %v1657 = vpop.f32.mrb[0].mxu0
      %v1658 = vadd.f32 0.0, %v1657
      %v1659 = vpop.f32.mrb[0].mxu0
      %1660 = vdwg.mxu0
      %1661 = vmatprep.subr.bf16.mxu0 0
      %1662 = vmatpush1.bf16.msra.mxu0 %v1572
      %1663 = vmatprep.subr.bf16.mxu0 0
      %1664 = vmatpush1.bf16.msra.mxu0 %v1573
      %1665 = vmatprep.subr.bf16.mxu0 0
      %1666 = vmatpush1.bf16.msra.mxu0 %v1574
      %1667 = vmatprep.subr.bf16.mxu0 0
      %1668 = vmatpush1.bf16.msra.mxu0 %v1575
      %1669 = vmatprep.subr.bf16.mxu0 0
      %1670 = vmatpush1.bf16.msra.mxu0 %v1576
      %1671 = vmatprep.subr.bf16.mxu0 0
      %1672 = vmatpush1.bf16.msra.mxu0 %v1577
      %1673 = vmatprep.subr.bf16.mxu0 0
      %1674 = vmatpush1.bf16.msra.mxu0 %v1578
      %1675 = vmatprep.subr.bf16.mxu0 0
      %1676 = vmatpush1.bf16.msra.mxu0 %v1579
      %1677 = vmatprep.subr.bf16.mxu0 0
      %1678 = vmatpush1.bf16.msra.mxu0 %v1580
      %1679 = vmatprep.subr.bf16.mxu0 0
      %1680 = vmatpush1.bf16.msra.mxu0 %v1581
      %1681 = vmatprep.subr.bf16.mxu0 0
      %1682 = vmatpush1.bf16.msra.mxu0 %v1582
      %1683 = vmatprep.subr.bf16.mxu0 0
      %1684 = vmatpush1.bf16.msra.mxu0 %v1583
      %1685 = vmatprep.subr.bf16.mxu0 0
      %1686 = vmatpush1.bf16.msra.mxu0 %v1584
      %1687 = vmatprep.subr.bf16.mxu0 0
      %1688 = vmatpush1.bf16.msra.mxu0 %v1585
      %1689 = vmatprep.subr.bf16.mxu0 0
      %1690 = vmatpush1.bf16.msra.mxu0 %v1586
      %1691 = vmatprep.subr.bf16.mxu0 0
      %1692 = vmatpush1.bf16.msra.mxu0 %v1587
      %1693 = vmatprep.mubr.bf16.mxu0 %v1363
      %1694 = vmatmul.mubr.bf16.gmra.mrb[0].mxu0 %v1362
      %v1695 = vpop.f32.mrb[0].mxu0
      %v1696 = vadd.f32 %v1655, %v1695
      %v1697 = vpop.f32.mrb[0].mxu0
      %v1698 = vpop.f32.mrb[0].mxu0
      %v1699 = vadd.f32 %v1658, %v1698
      %v1700 = vpop.f32.mrb[0].mxu0
      %1701 = vdwg.mxu0
      %v1702 = vadd.f32 %v977, %v1696
      %v1703 = vadd.f32 %v978, %v1699
      %v1704 = vld [vmem:[%s654] sm:$0x1]
      %v1706 = vlaneseq
      %v1707 = vshrl.u32 %v1706, 7
      %v1708 = vsub.s32 0, %v1707
      %v1709 = vrot.slane %v1704, %v1708
      %v1711 = vadd.f32 %v1702, %v1709
      %v1712 = vadd.f32 %v1703, %v1709
      %1713 = vst [vmem:[%s659] sm:$0xff] %v1711
      %1714 = vst [vmem:[%s659 + $0x8] sm:$0xff] %v1712
      %p1715 = scmp.lt.s32.totalorder %s28, 1
      %s1716 = scalar_select %p1715, %s28, 1
      %s1717 = smul.addr %s1716, 2
      %s1718 = smul.addr %s1717, 8
      %s1719 = scalar_lea.vmem %s13, %s1718
      // Predicated region
      $region77: #{mixsegnet_forward.4} parent=71 // pred_check
        %p1720 = pneg %p392
      $region78: #{mixsegnet_forward.4} parent=71 // pred_check_branch
        %1722 = sbr.rel (%p1720) target = $region80
      $region79: #{mixsegnet_forward.4} parent=71 // pred_region
        _
      $region80: #{mixsegnet_forward.4} parent=71 // pred_fallthru
        _
    $region72: #{mixsegnet_forward.4} parent=5 // pred_fallthru
      _
    %p1723 = scmp.le.s32.totalorder 2, %s19
    // Predicated region
    $region81: #{mixsegnet_forward.4} parent=5 // pred_check
      %p1724 = pneg %p1723
    $region82: #{mixsegnet_forward.4} parent=5 // pred_check_branch
      %1726 = sbr.rel (%p1724) target = $region84
    $region83: #{mixsegnet_forward.4} parent=5 // pred_region
      %s1727 = ssub.s32 %s19, 2
      // Predicated region
      $region85: #{mixsegnet_forward.4} parent=83 // pred_check
        %p1728 = pneg %p398
      $region86: #{mixsegnet_forward.4} parent=83 // pred_check_branch
        %1730 = sbr.rel (%p1728) target = $region88
      $region87: #{mixsegnet_forward.4} parent=83 // pred_region
        %p1731 = scmp.lt.s32.totalorder %s30, 1
        %s1732 = scalar_select %p1731, %s30, 1
        %s1733 = smul.addr %s1732, 2
        %s1734 = smul.addr %s1733, 8
        %s1735 = scalar_lea.vmem %s13, %s1734
      $region88: #{mixsegnet_forward.4} parent=83 // pred_fallthru
        _
    $region84: #{mixsegnet_forward.4} parent=5 // pred_fallthru
      _
  $region6: #{mixsegnet_forward.4} parent=0 // loop_footer
    %s23 = sadd.s32 1, %s19
  $region7: #{mixsegnet_forward.4} parent=0 // loop_footer_branch
    %18 = sbr.rel target = $region3
  $region8: #{mixsegnet_forward.4} parent=0 // loop_exit
    _

</llo_original>
